<compile_context>
chip_gen: v5e
topology: v5e:2x2
jax: 0.10.0
libtpu: 0.0.40
codegen_flags: <defaults>
</compile_context>

<pallas_src>
import functools

import jax
import jax.numpy as jnp
from jax import lax
from jax.experimental import pallas as pl
from jax.experimental.pallas import tpu as pltpu


CFG = dict(vocab=100, max_pos=16, type_vocab=2,
           hidden=32, heads=2, layers=2, intermediate=64, num_labels=2)
LANE = 128  # lane-dense padded width for the classifier output


# ----------------------------------------------------------------------------
# In-kernel helpers (operate on VMEM-resident jnp values)
# ----------------------------------------------------------------------------
def _gelu_tanh(x):
    # tanh-approximation GELU; exact-erf GELU differs by <1e-3 on these scales.
    return 0.5 * x * (1.0 + jnp.tanh(0.7978845608028654 * (x + 0.044715 * x * x * x)))


def _layer_norm(x, g, b, eps):
    mu = jnp.mean(x, axis=-1, keepdims=True)
    xc = x - mu
    var = jnp.mean(xc * xc, axis=-1, keepdims=True)
    return xc * lax.rsqrt(var + eps) * g + b


# ----------------------------------------------------------------------------
# Fused whole-model kernel: one grid step = one batch tile's full forward.
# ----------------------------------------------------------------------------
def _qa_bert_kernel(emb_ref, mask_ref, embln_ref, wqkv_ref, wo_ref, w1_ref,
                    w2_ref, vec_ref, clsw_ref, clsb_ref, logits_ref,
                    *, layers, heads, eps):
    Bt, S, H = emb_ref.shape
    I = w1_ref.shape[2]
    Dh = H // heads
    R = Bt * S
    scale = 1.0 / (Dh ** 0.5)

    # Embedding LayerNorm for the whole batch tile at once (R rows).
    x = _layer_norm(emb_ref[...].reshape(R, H),
                    embln_ref[0:1, :], embln_ref[1:2, :], eps)           # (R, H) f32

    for l in range(layers):
        wqkv = wqkv_ref[l]                       # (H, 3H) bf16, head-major [q|k|v]
        wo = wo_ref[l]                           # (H, H)  bf16
        w1 = w1_ref[l]                           # (H, I)  bf16
        w2 = w2_ref[l]                           # (I, H)  bf16
        vec = vec_ref[l]                         # (8, pad) f32 packed vector params
        bqkv = vec[0:1, :3 * H]
        bo = vec[1:2, :H]
        b1 = vec[2:3, :I]
        b2 = vec[3:4, :H]
        ln1g, ln1b = vec[4:5, :H], vec[5:6, :H]
        ln2g, ln2b = vec[6:7, :H], vec[7:8, :H]

        # Fused Q/K/V projection over the whole tile: (R, H) @ (H, 3H) + bias.
        qkv = jnp.dot(x.astype(jnp.bfloat16), wqkv,
                      preferred_element_type=jnp.float32) + bqkv          # (R, 3H) f32
        qkv_bf = qkv.astype(jnp.bfloat16)        # cast the whole slab ONCE per layer

        # Per-(batch, head) softmax on tiny S×S scores; per-head contexts are
        # concatenated and sent through ONE output-projection matmul.
        ctx_rows = []
        for b in range(Bt):
            bias = mask_ref[b:b + 1, :]                                   # (1, S)
            qkv_b = qkv_bf[b * S:(b + 1) * S, :]                          # (S, 3H)
            ctx_heads = []
            for h in range(heads):
                blk = qkv_b[:, h * 3 * Dh:(h + 1) * 3 * Dh]   # contiguous [q|k|v] window
                q = blk[:, :Dh]
                k = blk[:, Dh:2 * Dh]
                v = blk[:, 2 * Dh:3 * Dh]
                # q @ k^T without an explicit transpose: contract dim 1 of both.
                s = lax.dot_general(q, k, (((1,), (1,)), ((), ())),
                                    preferred_element_type=jnp.float32) * scale
                s = s + bias
                s = s - jnp.max(s, axis=-1, keepdims=True)
                p = jnp.exp(s)
                p = p * pl.reciprocal(jnp.sum(p, axis=-1, keepdims=True), approx=True)
                ctx_heads.append(jnp.dot(p.astype(jnp.bfloat16), v,
                                         preferred_element_type=jnp.float32))  # (S, Dh)
            ctx_rows.append(jnp.concatenate(ctx_heads, axis=1))           # (S, H)
        ctx = jnp.concatenate(ctx_rows, axis=0)                           # (R, H) f32

        attn = jnp.dot(ctx.astype(jnp.bfloat16), wo,
                       preferred_element_type=jnp.float32) + bo           # single Wo matmul
        x = _layer_norm(x + attn, ln1g, ln1b, eps)                        # add & norm

        # Feed-forward network with fused GELU (whole tile).
        ffn = jnp.dot(x.astype(jnp.bfloat16), w1,
                      preferred_element_type=jnp.float32) + b1
        ffn = _gelu_tanh(ffn)
        ffn = jnp.dot(ffn.astype(jnp.bfloat16), w2,
                      preferred_element_type=jnp.float32) + b2
        x = _layer_norm(x + ffn, ln2g, ln2b, eps)                         # add & norm

    # [CLS] rows (row 0 of every sequence) -> classifier, lane-dense (Bt, 128).
    # TODO(synk): nn.Dropout(0.1) is identity in eval mode; stochastic dropout
    # (pltpu.prng_random_bits mask) not applied.
    cls = jnp.concatenate([x[b * S:b * S + 1, :] for b in range(Bt)], axis=0)  # (Bt, H)
    logits_ref[...] = (jnp.dot(cls.astype(jnp.bfloat16), clsw_ref[...],
                               preferred_element_type=jnp.float32)
                       + clsb_ref[...])


# ----------------------------------------------------------------------------
# Parameter init: packed / stacked layout consumed by the fused kernel.
# ----------------------------------------------------------------------------
def init_params(key, cfg):
    H, I, L = cfg["hidden"], cfg["intermediate"], cfg["layers"]
    heads = cfg["heads"]
    Dh = H // heads
    VPAD = max(3 * H, I, H)

    def nrm(k, shape, std=0.02):
        return std * jax.random.normal(k, shape, dtype=jnp.float32)

    keys = iter(jax.random.split(key, 4 + 6 * L + 4))
    p = {
        "word_emb": nrm(next(keys), (cfg["vocab"], H)),
        "pos_emb": nrm(next(keys), (cfg["max_pos"], H)),
        "type_emb": nrm(next(keys), (cfg["type_vocab"], H)),
        # Embedding LayerNorm gamma/beta packed as (2, H).
        "emb_ln": jnp.concatenate([jnp.ones((1, H), jnp.float32),
                                   jnp.zeros((1, H), jnp.float32)], axis=0),
    }
    cls_w = nrm(next(keys), (H, cfg["num_labels"]))
    p["cls_w_pad"] = (jnp.zeros((H, LANE), jnp.float32)
                      .at[:, :cfg["num_labels"]].set(cls_w)).astype(jnp.bfloat16)
    p["cls_b_pad"] = jnp.zeros((1, LANE), jnp.float32)

    def row(v):
        return jnp.zeros((VPAD,), jnp.float32).at[:v.shape[0]].set(v)

    wqkv_l, wo_l, w1_l, w2_l, vec_l = [], [], [], [], []
    for _ in range(L):
        wq = nrm(next(keys), (H, H))
        wk = nrm(next(keys), (H, H))
        wv = nrm(next(keys), (H, H))
        # Head-major packing: [q_h | k_h | v_h] per head -> one contiguous
        # 3*Dh-lane window per head inside the kernel.
        blocks = []
        for h in range(heads):
            blocks += [wq[:, h * Dh:(h + 1) * Dh],
                       wk[:, h * Dh:(h + 1) * Dh],
                       wv[:, h * Dh:(h + 1) * Dh]]
        wqkv_l.append(jnp.concatenate(blocks, axis=1))        # (H, 3H)
        wo_l.append(nrm(next(keys), (H, H)))
        w1_l.append(nrm(next(keys), (H, I)))
        w2_l.append(nrm(next(keys), (I, H)))
        vec_l.append(jnp.stack([
            row(jnp.zeros((3 * H,), jnp.float32)),   # bqkv (head-major; zeros)
            row(jnp.zeros((H,), jnp.float32)),       # bo
            row(jnp.zeros((I,), jnp.float32)),       # b1
            row(jnp.zeros((H,), jnp.float32)),       # b2
            row(jnp.ones((H,), jnp.float32)),        # ln1_gamma
            row(jnp.zeros((H,), jnp.float32)),       # ln1_beta
            row(jnp.ones((H,), jnp.float32)),        # ln2_gamma
            row(jnp.zeros((H,), jnp.float32)),       # ln2_beta
        ], axis=0))                                  # (8, VPAD)

    p["wqkv"] = jnp.stack(wqkv_l).astype(jnp.bfloat16)   # (L, H, 3H)
    p["wo"] = jnp.stack(wo_l).astype(jnp.bfloat16)       # (L, H, H)
    p["w1"] = jnp.stack(w1_l).astype(jnp.bfloat16)       # (L, H, I)
    p["w2"] = jnp.stack(w2_l).astype(jnp.bfloat16)       # (L, I, H)
    p["vecs"] = jnp.stack(vec_l)                         # (L, 8, VPAD) f32
    return p


# ----------------------------------------------------------------------------
# Forward: embedding gather in JAX glue, everything else in one pallas_call.
# ----------------------------------------------------------------------------
def qa_classifier_forward(params, input_ids, attention_mask, cfg,
                          *, batch_tile=None, core_parallel=False):
    B, S = input_ids.shape
    H, L, Hn = cfg["hidden"], cfg["layers"], cfg["heads"]
    Bt = B if batch_tile is None else batch_tile
    assert B % Bt == 0, "batch must be divisible by batch_tile"

    # Embedding sum (word + position + token_type 0); gather stays in JAX.
    # TODO(synk): could be fused via PrefetchScalarGridSpec + pl.Element gather.
    emb = (params["word_emb"][input_ids]
           + params["pos_emb"][jnp.arange(S)][None, :, :]
           + params["type_emb"][0][None, None, :])                        # (B, S, H) f32
    # Additive attention mask: 0 for real tokens, -1e9 for padding.
    mask_bias = (1.0 - attention_mask.astype(jnp.float32)) * -1e9         # (B, S)

    kernel = functools.partial(_qa_bert_kernel, layers=L, heads=Hn, eps=1e-12)
    # On v7x with B // Bt >= 2, pass core_parallel=True so batch tiles actually
    # shard across the 2 TensorCores (plain "parallel" does not).
    sem = (pltpu.CORE_PARALLEL,) if core_parallel else ("parallel",)

    logits_pad = pl.pallas_call(
        kernel,
        out_shape=jax.ShapeDtypeStruct((B, LANE), jnp.float32),
        grid=(B // Bt,),
        in_specs=[
            pl.BlockSpec((Bt, S, H), lambda i: (i, 0, 0)),                 # emb (batch tile)
            pl.BlockSpec((Bt, S), lambda i: (i, 0)),                       # mask bias
            pl.BlockSpec(params["emb_ln"].shape, lambda i: (0, 0)),        # emb LN g/b
            pl.BlockSpec(params["wqkv"].shape, lambda i: (0, 0, 0)),       # stacked Wqkv
            pl.BlockSpec(params["wo"].shape, lambda i: (0, 0, 0)),         # stacked Wo
            pl.BlockSpec(params["w1"].shape, lambda i: (0, 0, 0)),         # stacked W1
            pl.BlockSpec(params["w2"].shape, lambda i: (0, 0, 0)),         # stacked W2
            pl.BlockSpec(params["vecs"].shape, lambda i: (0, 0, 0)),       # packed vectors
            pl.BlockSpec(params["cls_w_pad"].shape, lambda i: (0, 0)),     # classifier W
            pl.BlockSpec(params["cls_b_pad"].shape, lambda i: (0, 0)),     # classifier b
        ],
        out_specs=pl.BlockSpec((Bt, LANE), lambda i: (i, 0)),
        compiler_params=pltpu.CompilerParams(
            dimension_semantics=sem,
            vmem_limit_bytes=32 * 1024 * 1024),
    )(emb, mask_bias, params["emb_ln"], params["wqkv"], params["wo"],
      params["w1"], params["w2"], params["vecs"], params["cls_w_pad"],
      params["cls_b_pad"])

    return logits_pad[:, :cfg["num_labels"]]                               # (B, 2)


# ----------------------------------------------------------------------------
if __name__ == "__main__":
    key = jax.random.PRNGKey(0)
    pkey, ikey = jax.random.split(key)

    params = init_params(pkey, CFG)

    B, S = 2, 8
    input_ids = jax.random.randint(ikey, (B, S), 0, CFG["vocab"], dtype=jnp.int32)
    attention_mask = jnp.array(
        [[1, 1, 1, 1, 1, 1, 1, 1],
         [1, 1, 1, 1, 1, 0, 0, 0]], dtype=jnp.int32)

    logits = qa_classifier_forward(params, input_ids, attention_mask, CFG)
    logits = jax.block_until_ready(logits)

    assert logits.shape == (B, CFG["num_labels"]) and logits.dtype == jnp.float32
    assert bool(jnp.all(jnp.isfinite(logits)))
    print("KERNEL_OK")
</pallas_src>

<mosaic_0001>
module attributes {stable_mosaic.version = 11 : i64} {
  func.func @_qa_bert_kernel(%arg0: i32, %arg1: memref<2x8x32xf32, #tpu.memory_space<vmem>>, %arg2: memref<2x8xf32, #tpu.memory_space<vmem>>, %arg3: memref<2x32xf32, #tpu.memory_space<vmem>>, %arg4: memref<2x32x96xbf16, #tpu.memory_space<vmem>>, %arg5: memref<2x32x32xbf16, #tpu.memory_space<vmem>>, %arg6: memref<2x32x64xbf16, #tpu.memory_space<vmem>>, %arg7: memref<2x64x32xbf16, #tpu.memory_space<vmem>>, %arg8: memref<2x8x96xf32, #tpu.memory_space<vmem>>, %arg9: memref<32x128xbf16, #tpu.memory_space<vmem>>, %arg10: memref<1x128xf32, #tpu.memory_space<vmem>>, %arg11: memref<2x128xf32, #tpu.memory_space<vmem>>) attributes {dimension_semantics = [#tpu.dimension_semantics<parallel>], iteration_bounds = array<i64: 1>, scalar_prefetch = 0 : i64, scratch_operands = 0 : i64, tpu.core_type = #tpu.core_type<tc>, window_params = [{transform_indices = @transform_0, window_bounds = array<i64: 2, 8, 32>}, {transform_indices = @transform_1, window_bounds = array<i64: 2, 8>}, {pipeline_mode = #tpu.pipeline_mode<synchronous>, transform_indices = @transform_2, window_bounds = array<i64: 2, 32>}, {pipeline_mode = #tpu.pipeline_mode<synchronous>, transform_indices = @transform_3, window_bounds = array<i64: 2, 32, 96>}, {pipeline_mode = #tpu.pipeline_mode<synchronous>, transform_indices = @transform_4, window_bounds = array<i64: 2, 32, 32>}, {pipeline_mode = #tpu.pipeline_mode<synchronous>, transform_indices = @transform_5, window_bounds = array<i64: 2, 32, 64>}, {pipeline_mode = #tpu.pipeline_mode<synchronous>, transform_indices = @transform_6, window_bounds = array<i64: 2, 64, 32>}, {pipeline_mode = #tpu.pipeline_mode<synchronous>, transform_indices = @transform_7, window_bounds = array<i64: 2, 8, 96>}, {pipeline_mode = #tpu.pipeline_mode<synchronous>, transform_indices = @transform_8, window_bounds = array<i64: 32, 128>}, {pipeline_mode = #tpu.pipeline_mode<synchronous>, transform_indices = @transform_9, window_bounds = array<i64: 1, 128>}, {transform_indices = @transform_10, window_bounds = array<i64: 2, 128>}]} {
    %c0 = arith.constant 0 : index
    %c0_0 = arith.constant 0 : index
    %c0_1 = arith.constant 0 : index
    %0 = vector.load %arg1[%c0, %c0_0, %c0_1] : memref<2x8x32xf32, #tpu.memory_space<vmem>>, vector<2x8x32xf32>
    %1 = vector.shape_cast %0 : vector<2x8x32xf32> to vector<16x32xf32>
    %c0_2 = arith.constant 0 : index
    %c0_3 = arith.constant 0 : index
    %2 = vector.load %arg3[%c0_2, %c0_3] : memref<2x32xf32, #tpu.memory_space<vmem>>, vector<1x32xf32>
    %c1 = arith.constant 1 : index
    %c0_4 = arith.constant 0 : index
    %3 = vector.load %arg3[%c1, %c0_4] : memref<2x32xf32, #tpu.memory_space<vmem>>, vector<1x32xf32>
    %cst = arith.constant dense<0.000000e+00> : vector<16xf32>
    %4 = vector.multi_reduction <add>, %1, %cst [1] : vector<16x32xf32> to vector<16xf32>
    %5 = vector.shape_cast %4 : vector<16xf32> to vector<16x1xf32>
    %cst_5 = arith.constant 3.200000e+01 : f32
    %6 = vector.broadcast %cst_5 : f32 to vector<16x1xf32>
    %7 = arith.divf %5, %6 : vector<16x1xf32>
    %8 = vector.broadcast %7 : vector<16x1xf32> to vector<16x32xf32>
    %9 = arith.subf %1, %8 : vector<16x32xf32>
    %10 = arith.mulf %9, %9 : vector<16x32xf32>
    %cst_6 = arith.constant dense<0.000000e+00> : vector<16xf32>
    %11 = vector.multi_reduction <add>, %10, %cst_6 [1] : vector<16x32xf32> to vector<16xf32>
    %12 = vector.shape_cast %11 : vector<16xf32> to vector<16x1xf32>
    %cst_7 = arith.constant 3.200000e+01 : f32
    %13 = vector.broadcast %cst_7 : f32 to vector<16x1xf32>
    %14 = arith.divf %12, %13 : vector<16x1xf32>
    %cst_8 = arith.constant 9.99999996E-13 : f32
    %15 = vector.broadcast %cst_8 : f32 to vector<16x1xf32>
    %16 = arith.addf %14, %15 : vector<16x1xf32>
    %17 = math.rsqrt %16 : vector<16x1xf32>
    %18 = vector.broadcast %17 : vector<16x1xf32> to vector<16x32xf32>
    %19 = arith.mulf %9, %18 : vector<16x32xf32>
    %20 = vector.broadcast %2 : vector<1x32xf32> to vector<16x32xf32>
    %21 = arith.mulf %19, %20 : vector<16x32xf32>
    %22 = vector.broadcast %3 : vector<1x32xf32> to vector<16x32xf32>
    %23 = arith.addf %21, %22 : vector<16x32xf32>
    %c0_9 = arith.constant 0 : index
    %c0_10 = arith.constant 0 : index
    %c0_11 = arith.constant 0 : index
    %24 = vector.load %arg4[%c0_9, %c0_10, %c0_11] : memref<2x32x96xbf16, #tpu.memory_space<vmem>>, vector<1x32x96xbf16>
    %25 = vector.shape_cast %24 : vector<1x32x96xbf16> to vector<32x96xbf16>
    %c0_12 = arith.constant 0 : index
    %c0_13 = arith.constant 0 : index
    %c0_14 = arith.constant 0 : index
    %26 = vector.load %arg5[%c0_12, %c0_13, %c0_14] : memref<2x32x32xbf16, #tpu.memory_space<vmem>>, vector<1x32x32xbf16>
    %27 = vector.shape_cast %26 : vector<1x32x32xbf16> to vector<32x32xbf16>
    %c0_15 = arith.constant 0 : index
    %c0_16 = arith.constant 0 : index
    %c0_17 = arith.constant 0 : index
    %28 = vector.load %arg6[%c0_15, %c0_16, %c0_17] : memref<2x32x64xbf16, #tpu.memory_space<vmem>>, vector<1x32x64xbf16>
    %29 = vector.shape_cast %28 : vector<1x32x64xbf16> to vector<32x64xbf16>
    %c0_18 = arith.constant 0 : index
    %c0_19 = arith.constant 0 : index
    %c0_20 = arith.constant 0 : index
    %30 = vector.load %arg7[%c0_18, %c0_19, %c0_20] : memref<2x64x32xbf16, #tpu.memory_space<vmem>>, vector<1x64x32xbf16>
    %31 = vector.shape_cast %30 : vector<1x64x32xbf16> to vector<64x32xbf16>
    %c0_21 = arith.constant 0 : index
    %c0_22 = arith.constant 0 : index
    %c0_23 = arith.constant 0 : index
    %32 = vector.load %arg8[%c0_21, %c0_22, %c0_23] : memref<2x8x96xf32, #tpu.memory_space<vmem>>, vector<1x8x96xf32>
    %33 = vector.shape_cast %32 : vector<1x8x96xf32> to vector<8x96xf32>
    %34 = vector.extract_strided_slice %33 {offsets = [0, 0], sizes = [1, 96], strides = [1, 1]} : vector<8x96xf32> to vector<1x96xf32>
    %35 = vector.extract_strided_slice %33 {offsets = [1, 0], sizes = [1, 32], strides = [1, 1]} : vector<8x96xf32> to vector<1x32xf32>
    %36 = vector.extract_strided_slice %33 {offsets = [2, 0], sizes = [1, 64], strides = [1, 1]} : vector<8x96xf32> to vector<1x64xf32>
    %37 = vector.extract_strided_slice %33 {offsets = [3, 0], sizes = [1, 32], strides = [1, 1]} : vector<8x96xf32> to vector<1x32xf32>
    %38 = vector.extract_strided_slice %33 {offsets = [4, 0], sizes = [1, 32], strides = [1, 1]} : vector<8x96xf32> to vector<1x32xf32>
    %39 = vector.extract_strided_slice %33 {offsets = [5, 0], sizes = [1, 32], strides = [1, 1]} : vector<8x96xf32> to vector<1x32xf32>
    %40 = vector.extract_strided_slice %33 {offsets = [6, 0], sizes = [1, 32], strides = [1, 1]} : vector<8x96xf32> to vector<1x32xf32>
    %41 = vector.extract_strided_slice %33 {offsets = [7, 0], sizes = [1, 32], strides = [1, 1]} : vector<8x96xf32> to vector<1x32xf32>
    %42 = arith.truncf %23 : vector<16x32xf32> to vector<16x32xbf16>
    %cst_24 = arith.constant dense<0.000000e+00> : vector<16x96xf32>
    %43 = tpu.matmul %42, %25, %cst_24 {dimension_numbers = #tpu.dot_dimension_numbers<[1], [0], [0], [1], [0, 0, 1, 1], [], []>} : vector<16x32xbf16>, vector<32x96xbf16>, vector<16x96xf32> -> vector<16x96xf32>
    %44 = vector.broadcast %34 : vector<1x96xf32> to vector<16x96xf32>
    %45 = arith.addf %43, %44 : vector<16x96xf32>
    %46 = arith.truncf %45 : vector<16x96xf32> to vector<16x96xbf16>
    %c0_25 = arith.constant 0 : index
    %c0_26 = arith.constant 0 : index
    %47 = vector.load %arg2[%c0_25, %c0_26] : memref<2x8xf32, #tpu.memory_space<vmem>>, vector<1x8xf32>
    %48 = vector.extract_strided_slice %46 {offsets = [0, 0], sizes = [8, 96], strides = [1, 1]} : vector<16x96xbf16> to vector<8x96xbf16>
    %49 = vector.extract_strided_slice %48 {offsets = [0, 0], sizes = [8, 48], strides = [1, 1]} : vector<8x96xbf16> to vector<8x48xbf16>
    %50 = vector.extract_strided_slice %49 {offsets = [0, 0], sizes = [8, 16], strides = [1, 1]} : vector<8x48xbf16> to vector<8x16xbf16>
    %51 = vector.extract_strided_slice %49 {offsets = [0, 16], sizes = [8, 16], strides = [1, 1]} : vector<8x48xbf16> to vector<8x16xbf16>
    %52 = vector.extract_strided_slice %49 {offsets = [0, 32], sizes = [8, 16], strides = [1, 1]} : vector<8x48xbf16> to vector<8x16xbf16>
    %cst_27 = arith.constant dense<0.000000e+00> : vector<8x8xf32>
    %53 = tpu.matmul %50, %51, %cst_27 {dimension_numbers = #tpu.dot_dimension_numbers<[1], [1], [0], [0], [0, 0, 1, 0], [], []>} : vector<8x16xbf16>, vector<8x16xbf16>, vector<8x8xf32> -> vector<8x8xf32>
    %cst_28 = arith.constant 2.500000e-01 : f32
    %54 = vector.broadcast %cst_28 : f32 to vector<8x8xf32>
    %55 = arith.mulf %53, %54 : vector<8x8xf32>
    %56 = vector.broadcast %47 : vector<1x8xf32> to vector<8x8xf32>
    %57 = arith.addf %55, %56 : vector<8x8xf32>
    %cst_29 = arith.constant dense<0xFF800000> : vector<8xf32>
    %58 = vector.multi_reduction <maximumf>, %57, %cst_29 [1] : vector<8x8xf32> to vector<8xf32>
    %59 = vector.shape_cast %58 : vector<8xf32> to vector<8x1xf32>
    %60 = vector.broadcast %59 : vector<8x1xf32> to vector<8x8xf32>
    %61 = arith.subf %57, %60 : vector<8x8xf32>
    %62 = math.exp %61 : vector<8x8xf32>
    %cst_30 = arith.constant dense<0.000000e+00> : vector<8xf32>
    %63 = vector.multi_reduction <add>, %62, %cst_30 [1] : vector<8x8xf32> to vector<8xf32>
    %64 = vector.shape_cast %63 : vector<8xf32> to vector<8x1xf32>
    %65 = tpu.reciprocal %64 {approx = true} : vector<8x1xf32> -> vector<8x1xf32>
    %66 = vector.broadcast %65 : vector<8x1xf32> to vector<8x8xf32>
    %67 = arith.mulf %62, %66 : vector<8x8xf32>
    %68 = arith.truncf %67 : vector<8x8xf32> to vector<8x8xbf16>
    %cst_31 = arith.constant dense<0.000000e+00> : vector<8x16xf32>
    %69 = tpu.matmul %68, %52, %cst_31 {dimension_numbers = #tpu.dot_dimension_numbers<[1], [0], [0], [1], [0, 0, 1, 1], [], []>} : vector<8x8xbf16>, vector<8x16xbf16>, vector<8x16xf32> -> vector<8x16xf32>
    %70 = vector.extract_strided_slice %48 {offsets = [0, 48], sizes = [8, 48], strides = [1, 1]} : vector<8x96xbf16> to vector<8x48xbf16>
    %71 = vector.extract_strided_slice %70 {offsets = [0, 0], sizes = [8, 16], strides = [1, 1]} : vector<8x48xbf16> to vector<8x16xbf16>
    %72 = vector.extract_strided_slice %70 {offsets = [0, 16], sizes = [8, 16], strides = [1, 1]} : vector<8x48xbf16> to vector<8x16xbf16>
    %73 = vector.extract_strided_slice %70 {offsets = [0, 32], sizes = [8, 16], strides = [1, 1]} : vector<8x48xbf16> to vector<8x16xbf16>
    %cst_32 = arith.constant dense<0.000000e+00> : vector<8x8xf32>
    %74 = tpu.matmul %71, %72, %cst_32 {dimension_numbers = #tpu.dot_dimension_numbers<[1], [1], [0], [0], [0, 0, 1, 0], [], []>} : vector<8x16xbf16>, vector<8x16xbf16>, vector<8x8xf32> -> vector<8x8xf32>
    %cst_33 = arith.constant 2.500000e-01 : f32
    %75 = vector.broadcast %cst_33 : f32 to vector<8x8xf32>
    %76 = arith.mulf %74, %75 : vector<8x8xf32>
    %77 = vector.broadcast %47 : vector<1x8xf32> to vector<8x8xf32>
    %78 = arith.addf %76, %77 : vector<8x8xf32>
    %cst_34 = arith.constant dense<0xFF800000> : vector<8xf32>
    %79 = vector.multi_reduction <maximumf>, %78, %cst_34 [1] : vector<8x8xf32> to vector<8xf32>
    %80 = vector.shape_cast %79 : vector<8xf32> to vector<8x1xf32>
    %81 = vector.broadcast %80 : vector<8x1xf32> to vector<8x8xf32>
    %82 = arith.subf %78, %81 : vector<8x8xf32>
    %83 = math.exp %82 : vector<8x8xf32>
    %cst_35 = arith.constant dense<0.000000e+00> : vector<8xf32>
    %84 = vector.multi_reduction <add>, %83, %cst_35 [1] : vector<8x8xf32> to vector<8xf32>
    %85 = vector.shape_cast %84 : vector<8xf32> to vector<8x1xf32>
    %86 = tpu.reciprocal %85 {approx = true} : vector<8x1xf32> -> vector<8x1xf32>
    %87 = vector.broadcast %86 : vector<8x1xf32> to vector<8x8xf32>
    %88 = arith.mulf %83, %87 : vector<8x8xf32>
    %89 = arith.truncf %88 : vector<8x8xf32> to vector<8x8xbf16>
    %cst_36 = arith.constant dense<0.000000e+00> : vector<8x16xf32>
    %90 = tpu.matmul %89, %73, %cst_36 {dimension_numbers = #tpu.dot_dimension_numbers<[1], [0], [0], [1], [0, 0, 1, 1], [], []>} : vector<8x8xbf16>, vector<8x16xbf16>, vector<8x16xf32> -> vector<8x16xf32>
    %91 = tpu.concatenate %69, %90 in 1 : vector<8x16xf32>, vector<8x16xf32> -> vector<8x32xf32>
    %c1_37 = arith.constant 1 : index
    %c0_38 = arith.constant 0 : index
    %92 = vector.load %arg2[%c1_37, %c0_38] : memref<2x8xf32, #tpu.memory_space<vmem>>, vector<1x8xf32>
    %93 = vector.extract_strided_slice %46 {offsets = [8, 0], sizes = [8, 96], strides = [1, 1]} : vector<16x96xbf16> to vector<8x96xbf16>
    %94 = vector.extract_strided_slice %93 {offsets = [0, 0], sizes = [8, 48], strides = [1, 1]} : vector<8x96xbf16> to vector<8x48xbf16>
    %95 = vector.extract_strided_slice %94 {offsets = [0, 0], sizes = [8, 16], strides = [1, 1]} : vector<8x48xbf16> to vector<8x16xbf16>
    %96 = vector.extract_strided_slice %94 {offsets = [0, 16], sizes = [8, 16], strides = [1, 1]} : vector<8x48xbf16> to vector<8x16xbf16>
    %97 = vector.extract_strided_slice %94 {offsets = [0, 32], sizes = [8, 16], strides = [1, 1]} : vector<8x48xbf16> to vector<8x16xbf16>
    %cst_39 = arith.constant dense<0.000000e+00> : vector<8x8xf32>
    %98 = tpu.matmul %95, %96, %cst_39 {dimension_numbers = #tpu.dot_dimension_numbers<[1], [1], [0], [0], [0, 0, 1, 0], [], []>} : vector<8x16xbf16>, vector<8x16xbf16>, vector<8x8xf32> -> vector<8x8xf32>
    %cst_40 = arith.constant 2.500000e-01 : f32
    %99 = vector.broadcast %cst_40 : f32 to vector<8x8xf32>
    %100 = arith.mulf %98, %99 : vector<8x8xf32>
    %101 = vector.broadcast %92 : vector<1x8xf32> to vector<8x8xf32>
    %102 = arith.addf %100, %101 : vector<8x8xf32>
    %cst_41 = arith.constant dense<0xFF800000> : vector<8xf32>
    %103 = vector.multi_reduction <maximumf>, %102, %cst_41 [1] : vector<8x8xf32> to vector<8xf32>
    %104 = vector.shape_cast %103 : vector<8xf32> to vector<8x1xf32>
    %105 = vector.broadcast %104 : vector<8x1xf32> to vector<8x8xf32>
    %106 = arith.subf %102, %105 : vector<8x8xf32>
    %107 = math.exp %106 : vector<8x8xf32>
    %cst_42 = arith.constant dense<0.000000e+00> : vector<8xf32>
    %108 = vector.multi_reduction <add>, %107, %cst_42 [1] : vector<8x8xf32> to vector<8xf32>
    %109 = vector.shape_cast %108 : vector<8xf32> to vector<8x1xf32>
    %110 = tpu.reciprocal %109 {approx = true} : vector<8x1xf32> -> vector<8x1xf32>
    %111 = vector.broadcast %110 : vector<8x1xf32> to vector<8x8xf32>
    %112 = arith.mulf %107, %111 : vector<8x8xf32>
    %113 = arith.truncf %112 : vector<8x8xf32> to vector<8x8xbf16>
    %cst_43 = arith.constant dense<0.000000e+00> : vector<8x16xf32>
    %114 = tpu.matmul %113, %97, %cst_43 {dimension_numbers = #tpu.dot_dimension_numbers<[1], [0], [0], [1], [0, 0, 1, 1], [], []>} : vector<8x8xbf16>, vector<8x16xbf16>, vector<8x16xf32> -> vector<8x16xf32>
    %115 = vector.extract_strided_slice %93 {offsets = [0, 48], sizes = [8, 48], strides = [1, 1]} : vector<8x96xbf16> to vector<8x48xbf16>
    %116 = vector.extract_strided_slice %115 {offsets = [0, 0], sizes = [8, 16], strides = [1, 1]} : vector<8x48xbf16> to vector<8x16xbf16>
    %117 = vector.extract_strided_slice %115 {offsets = [0, 16], sizes = [8, 16], strides = [1, 1]} : vector<8x48xbf16> to vector<8x16xbf16>
    %118 = vector.extract_strided_slice %115 {offsets = [0, 32], sizes = [8, 16], strides = [1, 1]} : vector<8x48xbf16> to vector<8x16xbf16>
    %cst_44 = arith.constant dense<0.000000e+00> : vector<8x8xf32>
    %119 = tpu.matmul %116, %117, %cst_44 {dimension_numbers = #tpu.dot_dimension_numbers<[1], [1], [0], [0], [0, 0, 1, 0], [], []>} : vector<8x16xbf16>, vector<8x16xbf16>, vector<8x8xf32> -> vector<8x8xf32>
    %cst_45 = arith.constant 2.500000e-01 : f32
    %120 = vector.broadcast %cst_45 : f32 to vector<8x8xf32>
    %121 = arith.mulf %119, %120 : vector<8x8xf32>
    %122 = vector.broadcast %92 : vector<1x8xf32> to vector<8x8xf32>
    %123 = arith.addf %121, %122 : vector<8x8xf32>
    %cst_46 = arith.constant dense<0xFF800000> : vector<8xf32>
    %124 = vector.multi_reduction <maximumf>, %123, %cst_46 [1] : vector<8x8xf32> to vector<8xf32>
    %125 = vector.shape_cast %124 : vector<8xf32> to vector<8x1xf32>
    %126 = vector.broadcast %125 : vector<8x1xf32> to vector<8x8xf32>
    %127 = arith.subf %123, %126 : vector<8x8xf32>
    %128 = math.exp %127 : vector<8x8xf32>
    %cst_47 = arith.constant dense<0.000000e+00> : vector<8xf32>
    %129 = vector.multi_reduction <add>, %128, %cst_47 [1] : vector<8x8xf32> to vector<8xf32>
    %130 = vector.shape_cast %129 : vector<8xf32> to vector<8x1xf32>
    %131 = tpu.reciprocal %130 {approx = true} : vector<8x1xf32> -> vector<8x1xf32>
    %132 = vector.broadcast %131 : vector<8x1xf32> to vector<8x8xf32>
    %133 = arith.mulf %128, %132 : vector<8x8xf32>
    %134 = arith.truncf %133 : vector<8x8xf32> to vector<8x8xbf16>
    %cst_48 = arith.constant dense<0.000000e+00> : vector<8x16xf32>
    %135 = tpu.matmul %134, %118, %cst_48 {dimension_numbers = #tpu.dot_dimension_numbers<[1], [0], [0], [1], [0, 0, 1, 1], [], []>} : vector<8x8xbf16>, vector<8x16xbf16>, vector<8x16xf32> -> vector<8x16xf32>
    %136 = tpu.concatenate %114, %135 in 1 : vector<8x16xf32>, vector<8x16xf32> -> vector<8x32xf32>
    %137 = tpu.concatenate %91, %136 in 0 : vector<8x32xf32>, vector<8x32xf32> -> vector<16x32xf32>
    %138 = arith.truncf %137 : vector<16x32xf32> to vector<16x32xbf16>
    %cst_49 = arith.constant dense<0.000000e+00> : vector<16x32xf32>
    %139 = tpu.matmul %138, %27, %cst_49 {dimension_numbers = #tpu.dot_dimension_numbers<[1], [0], [0], [1], [0, 0, 1, 1], [], []>} : vector<16x32xbf16>, vector<32x32xbf16>, vector<16x32xf32> -> vector<16x32xf32>
    %140 = vector.broadcast %35 : vector<1x32xf32> to vector<16x32xf32>
    %141 = arith.addf %139, %140 : vector<16x32xf32>
    %142 = arith.addf %23, %141 : vector<16x32xf32>
    %cst_50 = arith.constant dense<0.000000e+00> : vector<16xf32>
    %143 = vector.multi_reduction <add>, %142, %cst_50 [1] : vector<16x32xf32> to vector<16xf32>
    %144 = vector.shape_cast %143 : vector<16xf32> to vector<16x1xf32>
    %cst_51 = arith.constant 3.200000e+01 : f32
    %145 = vector.broadcast %cst_51 : f32 to vector<16x1xf32>
    %146 = arith.divf %144, %145 : vector<16x1xf32>
    %147 = vector.broadcast %146 : vector<16x1xf32> to vector<16x32xf32>
    %148 = arith.subf %142, %147 : vector<16x32xf32>
    %149 = arith.mulf %148, %148 : vector<16x32xf32>
    %cst_52 = arith.constant dense<0.000000e+00> : vector<16xf32>
    %150 = vector.multi_reduction <add>, %149, %cst_52 [1] : vector<16x32xf32> to vector<16xf32>
    %151 = vector.shape_cast %150 : vector<16xf32> to vector<16x1xf32>
    %cst_53 = arith.constant 3.200000e+01 : f32
    %152 = vector.broadcast %cst_53 : f32 to vector<16x1xf32>
    %153 = arith.divf %151, %152 : vector<16x1xf32>
    %cst_54 = arith.constant 9.99999996E-13 : f32
    %154 = vector.broadcast %cst_54 : f32 to vector<16x1xf32>
    %155 = arith.addf %153, %154 : vector<16x1xf32>
    %156 = math.rsqrt %155 : vector<16x1xf32>
    %157 = vector.broadcast %156 : vector<16x1xf32> to vector<16x32xf32>
    %158 = arith.mulf %148, %157 : vector<16x32xf32>
    %159 = vector.broadcast %38 : vector<1x32xf32> to vector<16x32xf32>
    %160 = arith.mulf %158, %159 : vector<16x32xf32>
    %161 = vector.broadcast %39 : vector<1x32xf32> to vector<16x32xf32>
    %162 = arith.addf %160, %161 : vector<16x32xf32>
    %163 = arith.truncf %162 : vector<16x32xf32> to vector<16x32xbf16>
    %cst_55 = arith.constant dense<0.000000e+00> : vector<16x64xf32>
    %164 = tpu.matmul %163, %29, %cst_55 {dimension_numbers = #tpu.dot_dimension_numbers<[1], [0], [0], [1], [0, 0, 1, 1], [], []>} : vector<16x32xbf16>, vector<32x64xbf16>, vector<16x64xf32> -> vector<16x64xf32>
    %165 = vector.broadcast %36 : vector<1x64xf32> to vector<16x64xf32>
    %166 = arith.addf %164, %165 : vector<16x64xf32>
    %cst_56 = arith.constant 5.000000e-01 : f32
    %167 = vector.broadcast %cst_56 : f32 to vector<16x64xf32>
    %168 = arith.mulf %167, %166 : vector<16x64xf32>
    %cst_57 = arith.constant 4.471500e-02 : f32
    %169 = vector.broadcast %cst_57 : f32 to vector<16x64xf32>
    %170 = arith.mulf %169, %166 : vector<16x64xf32>
    %171 = arith.mulf %170, %166 : vector<16x64xf32>
    %172 = arith.mulf %171, %166 : vector<16x64xf32>
    %173 = arith.addf %166, %172 : vector<16x64xf32>
    %cst_58 = arith.constant 0.797884583 : f32
    %174 = vector.broadcast %cst_58 : f32 to vector<16x64xf32>
    %175 = arith.mulf %174, %173 : vector<16x64xf32>
    %176 = math.tanh %175 : vector<16x64xf32>
    %cst_59 = arith.constant 1.000000e+00 : f32
    %177 = vector.broadcast %cst_59 : f32 to vector<16x64xf32>
    %178 = arith.addf %177, %176 : vector<16x64xf32>
    %179 = arith.mulf %168, %178 : vector<16x64xf32>
    %180 = arith.truncf %179 : vector<16x64xf32> to vector<16x64xbf16>
    %cst_60 = arith.constant dense<0.000000e+00> : vector<16x32xf32>
    %181 = tpu.matmul %180, %31, %cst_60 {dimension_numbers = #tpu.dot_dimension_numbers<[1], [0], [0], [1], [0, 0, 1, 1], [], []>} : vector<16x64xbf16>, vector<64x32xbf16>, vector<16x32xf32> -> vector<16x32xf32>
    %182 = vector.broadcast %37 : vector<1x32xf32> to vector<16x32xf32>
    %183 = arith.addf %181, %182 : vector<16x32xf32>
    %184 = arith.addf %162, %183 : vector<16x32xf32>
    %cst_61 = arith.constant dense<0.000000e+00> : vector<16xf32>
    %185 = vector.multi_reduction <add>, %184, %cst_61 [1] : vector<16x32xf32> to vector<16xf32>
    %186 = vector.shape_cast %185 : vector<16xf32> to vector<16x1xf32>
    %cst_62 = arith.constant 3.200000e+01 : f32
    %187 = vector.broadcast %cst_62 : f32 to vector<16x1xf32>
    %188 = arith.divf %186, %187 : vector<16x1xf32>
    %189 = vector.broadcast %188 : vector<16x1xf32> to vector<16x32xf32>
    %190 = arith.subf %184, %189 : vector<16x32xf32>
    %191 = arith.mulf %190, %190 : vector<16x32xf32>
    %cst_63 = arith.constant dense<0.000000e+00> : vector<16xf32>
    %192 = vector.multi_reduction <add>, %191, %cst_63 [1] : vector<16x32xf32> to vector<16xf32>
    %193 = vector.shape_cast %192 : vector<16xf32> to vector<16x1xf32>
    %cst_64 = arith.constant 3.200000e+01 : f32
    %194 = vector.broadcast %cst_64 : f32 to vector<16x1xf32>
    %195 = arith.divf %193, %194 : vector<16x1xf32>
    %cst_65 = arith.constant 9.99999996E-13 : f32
    %196 = vector.broadcast %cst_65 : f32 to vector<16x1xf32>
    %197 = arith.addf %195, %196 : vector<16x1xf32>
    %198 = math.rsqrt %197 : vector<16x1xf32>
    %199 = vector.broadcast %198 : vector<16x1xf32> to vector<16x32xf32>
    %200 = arith.mulf %190, %199 : vector<16x32xf32>
    %201 = vector.broadcast %40 : vector<1x32xf32> to vector<16x32xf32>
    %202 = arith.mulf %200, %201 : vector<16x32xf32>
    %203 = vector.broadcast %41 : vector<1x32xf32> to vector<16x32xf32>
    %204 = arith.addf %202, %203 : vector<16x32xf32>
    %c1_66 = arith.constant 1 : index
    %c0_67 = arith.constant 0 : index
    %c0_68 = arith.constant 0 : index
    %205 = vector.load %arg4[%c1_66, %c0_67, %c0_68] : memref<2x32x96xbf16, #tpu.memory_space<vmem>>, vector<1x32x96xbf16>
    %206 = vector.shape_cast %205 : vector<1x32x96xbf16> to vector<32x96xbf16>
    %c1_69 = arith.constant 1 : index
    %c0_70 = arith.constant 0 : index
    %c0_71 = arith.constant 0 : index
    %207 = vector.load %arg5[%c1_69, %c0_70, %c0_71] : memref<2x32x32xbf16, #tpu.memory_space<vmem>>, vector<1x32x32xbf16>
    %208 = vector.shape_cast %207 : vector<1x32x32xbf16> to vector<32x32xbf16>
    %c1_72 = arith.constant 1 : index
    %c0_73 = arith.constant 0 : index
    %c0_74 = arith.constant 0 : index
    %209 = vector.load %arg6[%c1_72, %c0_73, %c0_74] : memref<2x32x64xbf16, #tpu.memory_space<vmem>>, vector<1x32x64xbf16>
    %210 = vector.shape_cast %209 : vector<1x32x64xbf16> to vector<32x64xbf16>
    %c1_75 = arith.constant 1 : index
    %c0_76 = arith.constant 0 : index
    %c0_77 = arith.constant 0 : index
    %211 = vector.load %arg7[%c1_75, %c0_76, %c0_77] : memref<2x64x32xbf16, #tpu.memory_space<vmem>>, vector<1x64x32xbf16>
    %212 = vector.shape_cast %211 : vector<1x64x32xbf16> to vector<64x32xbf16>
    %c1_78 = arith.constant 1 : index
    %c0_79 = arith.constant 0 : index
    %c0_80 = arith.constant 0 : index
    %213 = vector.load %arg8[%c1_78, %c0_79, %c0_80] : memref<2x8x96xf32, #tpu.memory_space<vmem>>, vector<1x8x96xf32>
    %214 = vector.shape_cast %213 : vector<1x8x96xf32> to vector<8x96xf32>
    %215 = vector.extract_strided_slice %214 {offsets = [0, 0], sizes = [1, 96], strides = [1, 1]} : vector<8x96xf32> to vector<1x96xf32>
    %216 = vector.extract_strided_slice %214 {offsets = [1, 0], sizes = [1, 32], strides = [1, 1]} : vector<8x96xf32> to vector<1x32xf32>
    %217 = vector.extract_strided_slice %214 {offsets = [2, 0], sizes = [1, 64], strides = [1, 1]} : vector<8x96xf32> to vector<1x64xf32>
    %218 = vector.extract_strided_slice %214 {offsets = [3, 0], sizes = [1, 32], strides = [1, 1]} : vector<8x96xf32> to vector<1x32xf32>
    %219 = vector.extract_strided_slice %214 {offsets = [4, 0], sizes = [1, 32], strides = [1, 1]} : vector<8x96xf32> to vector<1x32xf32>
    %220 = vector.extract_strided_slice %214 {offsets = [5, 0], sizes = [1, 32], strides = [1, 1]} : vector<8x96xf32> to vector<1x32xf32>
    %221 = vector.extract_strided_slice %214 {offsets = [6, 0], sizes = [1, 32], strides = [1, 1]} : vector<8x96xf32> to vector<1x32xf32>
    %222 = vector.extract_strided_slice %214 {offsets = [7, 0], sizes = [1, 32], strides = [1, 1]} : vector<8x96xf32> to vector<1x32xf32>
    %223 = arith.truncf %204 : vector<16x32xf32> to vector<16x32xbf16>
    %cst_81 = arith.constant dense<0.000000e+00> : vector<16x96xf32>
    %224 = tpu.matmul %223, %206, %cst_81 {dimension_numbers = #tpu.dot_dimension_numbers<[1], [0], [0], [1], [0, 0, 1, 1], [], []>} : vector<16x32xbf16>, vector<32x96xbf16>, vector<16x96xf32> -> vector<16x96xf32>
    %225 = vector.broadcast %215 : vector<1x96xf32> to vector<16x96xf32>
    %226 = arith.addf %224, %225 : vector<16x96xf32>
    %227 = arith.truncf %226 : vector<16x96xf32> to vector<16x96xbf16>
    %c0_82 = arith.constant 0 : index
    %c0_83 = arith.constant 0 : index
    %228 = vector.load %arg2[%c0_82, %c0_83] : memref<2x8xf32, #tpu.memory_space<vmem>>, vector<1x8xf32>
    %229 = vector.extract_strided_slice %227 {offsets = [0, 0], sizes = [8, 96], strides = [1, 1]} : vector<16x96xbf16> to vector<8x96xbf16>
    %230 = vector.extract_strided_slice %229 {offsets = [0, 0], sizes = [8, 48], strides = [1, 1]} : vector<8x96xbf16> to vector<8x48xbf16>
    %231 = vector.extract_strided_slice %230 {offsets = [0, 0], sizes = [8, 16], strides = [1, 1]} : vector<8x48xbf16> to vector<8x16xbf16>
    %232 = vector.extract_strided_slice %230 {offsets = [0, 16], sizes = [8, 16], strides = [1, 1]} : vector<8x48xbf16> to vector<8x16xbf16>
    %233 = vector.extract_strided_slice %230 {offsets = [0, 32], sizes = [8, 16], strides = [1, 1]} : vector<8x48xbf16> to vector<8x16xbf16>
    %cst_84 = arith.constant dense<0.000000e+00> : vector<8x8xf32>
    %234 = tpu.matmul %231, %232, %cst_84 {dimension_numbers = #tpu.dot_dimension_numbers<[1], [1], [0], [0], [0, 0, 1, 0], [], []>} : vector<8x16xbf16>, vector<8x16xbf16>, vector<8x8xf32> -> vector<8x8xf32>
    %cst_85 = arith.constant 2.500000e-01 : f32
    %235 = vector.broadcast %cst_85 : f32 to vector<8x8xf32>
    %236 = arith.mulf %234, %235 : vector<8x8xf32>
    %237 = vector.broadcast %228 : vector<1x8xf32> to vector<8x8xf32>
    %238 = arith.addf %236, %237 : vector<8x8xf32>
    %cst_86 = arith.constant dense<0xFF800000> : vector<8xf32>
    %239 = vector.multi_reduction <maximumf>, %238, %cst_86 [1] : vector<8x8xf32> to vector<8xf32>
    %240 = vector.shape_cast %239 : vector<8xf32> to vector<8x1xf32>
    %241 = vector.broadcast %240 : vector<8x1xf32> to vector<8x8xf32>
    %242 = arith.subf %238, %241 : vector<8x8xf32>
    %243 = math.exp %242 : vector<8x8xf32>
    %cst_87 = arith.constant dense<0.000000e+00> : vector<8xf32>
    %244 = vector.multi_reduction <add>, %243, %cst_87 [1] : vector<8x8xf32> to vector<8xf32>
    %245 = vector.shape_cast %244 : vector<8xf32> to vector<8x1xf32>
    %246 = tpu.reciprocal %245 {approx = true} : vector<8x1xf32> -> vector<8x1xf32>
    %247 = vector.broadcast %246 : vector<8x1xf32> to vector<8x8xf32>
    %248 = arith.mulf %243, %247 : vector<8x8xf32>
    %249 = arith.truncf %248 : vector<8x8xf32> to vector<8x8xbf16>
    %cst_88 = arith.constant dense<0.000000e+00> : vector<8x16xf32>
    %250 = tpu.matmul %249, %233, %cst_88 {dimension_numbers = #tpu.dot_dimension_numbers<[1], [0], [0], [1], [0, 0, 1, 1], [], []>} : vector<8x8xbf16>, vector<8x16xbf16>, vector<8x16xf32> -> vector<8x16xf32>
    %251 = vector.extract_strided_slice %229 {offsets = [0, 48], sizes = [8, 48], strides = [1, 1]} : vector<8x96xbf16> to vector<8x48xbf16>
    %252 = vector.extract_strided_slice %251 {offsets = [0, 0], sizes = [8, 16], strides = [1, 1]} : vector<8x48xbf16> to vector<8x16xbf16>
    %253 = vector.extract_strided_slice %251 {offsets = [0, 16], sizes = [8, 16], strides = [1, 1]} : vector<8x48xbf16> to vector<8x16xbf16>
    %254 = vector.extract_strided_slice %251 {offsets = [0, 32], sizes = [8, 16], strides = [1, 1]} : vector<8x48xbf16> to vector<8x16xbf16>
    %cst_89 = arith.constant dense<0.000000e+00> : vector<8x8xf32>
    %255 = tpu.matmul %252, %253, %cst_89 {dimension_numbers = #tpu.dot_dimension_numbers<[1], [1], [0], [0], [0, 0, 1, 0], [], []>} : vector<8x16xbf16>, vector<8x16xbf16>, vector<8x8xf32> -> vector<8x8xf32>
    %cst_90 = arith.constant 2.500000e-01 : f32
    %256 = vector.broadcast %cst_90 : f32 to vector<8x8xf32>
    %257 = arith.mulf %255, %256 : vector<8x8xf32>
    %258 = vector.broadcast %228 : vector<1x8xf32> to vector<8x8xf32>
    %259 = arith.addf %257, %258 : vector<8x8xf32>
    %cst_91 = arith.constant dense<0xFF800000> : vector<8xf32>
    %260 = vector.multi_reduction <maximumf>, %259, %cst_91 [1] : vector<8x8xf32> to vector<8xf32>
    %261 = vector.shape_cast %260 : vector<8xf32> to vector<8x1xf32>
    %262 = vector.broadcast %261 : vector<8x1xf32> to vector<8x8xf32>
    %263 = arith.subf %259, %262 : vector<8x8xf32>
    %264 = math.exp %263 : vector<8x8xf32>
    %cst_92 = arith.constant dense<0.000000e+00> : vector<8xf32>
    %265 = vector.multi_reduction <add>, %264, %cst_92 [1] : vector<8x8xf32> to vector<8xf32>
    %266 = vector.shape_cast %265 : vector<8xf32> to vector<8x1xf32>
    %267 = tpu.reciprocal %266 {approx = true} : vector<8x1xf32> -> vector<8x1xf32>
    %268 = vector.broadcast %267 : vector<8x1xf32> to vector<8x8xf32>
    %269 = arith.mulf %264, %268 : vector<8x8xf32>
    %270 = arith.truncf %269 : vector<8x8xf32> to vector<8x8xbf16>
    %cst_93 = arith.constant dense<0.000000e+00> : vector<8x16xf32>
    %271 = tpu.matmul %270, %254, %cst_93 {dimension_numbers = #tpu.dot_dimension_numbers<[1], [0], [0], [1], [0, 0, 1, 1], [], []>} : vector<8x8xbf16>, vector<8x16xbf16>, vector<8x16xf32> -> vector<8x16xf32>
    %272 = tpu.concatenate %250, %271 in 1 : vector<8x16xf32>, vector<8x16xf32> -> vector<8x32xf32>
    %c1_94 = arith.constant 1 : index
    %c0_95 = arith.constant 0 : index
    %273 = vector.load %arg2[%c1_94, %c0_95] : memref<2x8xf32, #tpu.memory_space<vmem>>, vector<1x8xf32>
    %274 = vector.extract_strided_slice %227 {offsets = [8, 0], sizes = [8, 96], strides = [1, 1]} : vector<16x96xbf16> to vector<8x96xbf16>
    %275 = vector.extract_strided_slice %274 {offsets = [0, 0], sizes = [8, 48], strides = [1, 1]} : vector<8x96xbf16> to vector<8x48xbf16>
    %276 = vector.extract_strided_slice %275 {offsets = [0, 0], sizes = [8, 16], strides = [1, 1]} : vector<8x48xbf16> to vector<8x16xbf16>
    %277 = vector.extract_strided_slice %275 {offsets = [0, 16], sizes = [8, 16], strides = [1, 1]} : vector<8x48xbf16> to vector<8x16xbf16>
    %278 = vector.extract_strided_slice %275 {offsets = [0, 32], sizes = [8, 16], strides = [1, 1]} : vector<8x48xbf16> to vector<8x16xbf16>
    %cst_96 = arith.constant dense<0.000000e+00> : vector<8x8xf32>
    %279 = tpu.matmul %276, %277, %cst_96 {dimension_numbers = #tpu.dot_dimension_numbers<[1], [1], [0], [0], [0, 0, 1, 0], [], []>} : vector<8x16xbf16>, vector<8x16xbf16>, vector<8x8xf32> -> vector<8x8xf32>
    %cst_97 = arith.constant 2.500000e-01 : f32
    %280 = vector.broadcast %cst_97 : f32 to vector<8x8xf32>
    %281 = arith.mulf %279, %280 : vector<8x8xf32>
    %282 = vector.broadcast %273 : vector<1x8xf32> to vector<8x8xf32>
    %283 = arith.addf %281, %282 : vector<8x8xf32>
    %cst_98 = arith.constant dense<0xFF800000> : vector<8xf32>
    %284 = vector.multi_reduction <maximumf>, %283, %cst_98 [1] : vector<8x8xf32> to vector<8xf32>
    %285 = vector.shape_cast %284 : vector<8xf32> to vector<8x1xf32>
    %286 = vector.broadcast %285 : vector<8x1xf32> to vector<8x8xf32>
    %287 = arith.subf %283, %286 : vector<8x8xf32>
    %288 = math.exp %287 : vector<8x8xf32>
    %cst_99 = arith.constant dense<0.000000e+00> : vector<8xf32>
    %289 = vector.multi_reduction <add>, %288, %cst_99 [1] : vector<8x8xf32> to vector<8xf32>
    %290 = vector.shape_cast %289 : vector<8xf32> to vector<8x1xf32>
    %291 = tpu.reciprocal %290 {approx = true} : vector<8x1xf32> -> vector<8x1xf32>
    %292 = vector.broadcast %291 : vector<8x1xf32> to vector<8x8xf32>
    %293 = arith.mulf %288, %292 : vector<8x8xf32>
    %294 = arith.truncf %293 : vector<8x8xf32> to vector<8x8xbf16>
    %cst_100 = arith.constant dense<0.000000e+00> : vector<8x16xf32>
    %295 = tpu.matmul %294, %278, %cst_100 {dimension_numbers = #tpu.dot_dimension_numbers<[1], [0], [0], [1], [0, 0, 1, 1], [], []>} : vector<8x8xbf16>, vector<8x16xbf16>, vector<8x16xf32> -> vector<8x16xf32>
    %296 = vector.extract_strided_slice %274 {offsets = [0, 48], sizes = [8, 48], strides = [1, 1]} : vector<8x96xbf16> to vector<8x48xbf16>
    %297 = vector.extract_strided_slice %296 {offsets = [0, 0], sizes = [8, 16], strides = [1, 1]} : vector<8x48xbf16> to vector<8x16xbf16>
    %298 = vector.extract_strided_slice %296 {offsets = [0, 16], sizes = [8, 16], strides = [1, 1]} : vector<8x48xbf16> to vector<8x16xbf16>
    %299 = vector.extract_strided_slice %296 {offsets = [0, 32], sizes = [8, 16], strides = [1, 1]} : vector<8x48xbf16> to vector<8x16xbf16>
    %cst_101 = arith.constant dense<0.000000e+00> : vector<8x8xf32>
    %300 = tpu.matmul %297, %298, %cst_101 {dimension_numbers = #tpu.dot_dimension_numbers<[1], [1], [0], [0], [0, 0, 1, 0], [], []>} : vector<8x16xbf16>, vector<8x16xbf16>, vector<8x8xf32> -> vector<8x8xf32>
    %cst_102 = arith.constant 2.500000e-01 : f32
    %301 = vector.broadcast %cst_102 : f32 to vector<8x8xf32>
    %302 = arith.mulf %300, %301 : vector<8x8xf32>
    %303 = vector.broadcast %273 : vector<1x8xf32> to vector<8x8xf32>
    %304 = arith.addf %302, %303 : vector<8x8xf32>
    %cst_103 = arith.constant dense<0xFF800000> : vector<8xf32>
    %305 = vector.multi_reduction <maximumf>, %304, %cst_103 [1] : vector<8x8xf32> to vector<8xf32>
    %306 = vector.shape_cast %305 : vector<8xf32> to vector<8x1xf32>
    %307 = vector.broadcast %306 : vector<8x1xf32> to vector<8x8xf32>
    %308 = arith.subf %304, %307 : vector<8x8xf32>
    %309 = math.exp %308 : vector<8x8xf32>
    %cst_104 = arith.constant dense<0.000000e+00> : vector<8xf32>
    %310 = vector.multi_reduction <add>, %309, %cst_104 [1] : vector<8x8xf32> to vector<8xf32>
    %311 = vector.shape_cast %310 : vector<8xf32> to vector<8x1xf32>
    %312 = tpu.reciprocal %311 {approx = true} : vector<8x1xf32> -> vector<8x1xf32>
    %313 = vector.broadcast %312 : vector<8x1xf32> to vector<8x8xf32>
    %314 = arith.mulf %309, %313 : vector<8x8xf32>
    %315 = arith.truncf %314 : vector<8x8xf32> to vector<8x8xbf16>
    %cst_105 = arith.constant dense<0.000000e+00> : vector<8x16xf32>
    %316 = tpu.matmul %315, %299, %cst_105 {dimension_numbers = #tpu.dot_dimension_numbers<[1], [0], [0], [1], [0, 0, 1, 1], [], []>} : vector<8x8xbf16>, vector<8x16xbf16>, vector<8x16xf32> -> vector<8x16xf32>
    %317 = tpu.concatenate %295, %316 in 1 : vector<8x16xf32>, vector<8x16xf32> -> vector<8x32xf32>
    %318 = tpu.concatenate %272, %317 in 0 : vector<8x32xf32>, vector<8x32xf32> -> vector<16x32xf32>
    %319 = arith.truncf %318 : vector<16x32xf32> to vector<16x32xbf16>
    %cst_106 = arith.constant dense<0.000000e+00> : vector<16x32xf32>
    %320 = tpu.matmul %319, %208, %cst_106 {dimension_numbers = #tpu.dot_dimension_numbers<[1], [0], [0], [1], [0, 0, 1, 1], [], []>} : vector<16x32xbf16>, vector<32x32xbf16>, vector<16x32xf32> -> vector<16x32xf32>
    %321 = vector.broadcast %216 : vector<1x32xf32> to vector<16x32xf32>
    %322 = arith.addf %320, %321 : vector<16x32xf32>
    %323 = arith.addf %204, %322 : vector<16x32xf32>
    %cst_107 = arith.constant dense<0.000000e+00> : vector<16xf32>
    %324 = vector.multi_reduction <add>, %323, %cst_107 [1] : vector<16x32xf32> to vector<16xf32>
    %325 = vector.shape_cast %324 : vector<16xf32> to vector<16x1xf32>
    %cst_108 = arith.constant 3.200000e+01 : f32
    %326 = vector.broadcast %cst_108 : f32 to vector<16x1xf32>
    %327 = arith.divf %325, %326 : vector<16x1xf32>
    %328 = vector.broadcast %327 : vector<16x1xf32> to vector<16x32xf32>
    %329 = arith.subf %323, %328 : vector<16x32xf32>
    %330 = arith.mulf %329, %329 : vector<16x32xf32>
    %cst_109 = arith.constant dense<0.000000e+00> : vector<16xf32>
    %331 = vector.multi_reduction <add>, %330, %cst_109 [1] : vector<16x32xf32> to vector<16xf32>
    %332 = vector.shape_cast %331 : vector<16xf32> to vector<16x1xf32>
    %cst_110 = arith.constant 3.200000e+01 : f32
    %333 = vector.broadcast %cst_110 : f32 to vector<16x1xf32>
    %334 = arith.divf %332, %333 : vector<16x1xf32>
    %cst_111 = arith.constant 9.99999996E-13 : f32
    %335 = vector.broadcast %cst_111 : f32 to vector<16x1xf32>
    %336 = arith.addf %334, %335 : vector<16x1xf32>
    %337 = math.rsqrt %336 : vector<16x1xf32>
    %338 = vector.broadcast %337 : vector<16x1xf32> to vector<16x32xf32>
    %339 = arith.mulf %329, %338 : vector<16x32xf32>
    %340 = vector.broadcast %219 : vector<1x32xf32> to vector<16x32xf32>
    %341 = arith.mulf %339, %340 : vector<16x32xf32>
    %342 = vector.broadcast %220 : vector<1x32xf32> to vector<16x32xf32>
    %343 = arith.addf %341, %342 : vector<16x32xf32>
    %344 = arith.truncf %343 : vector<16x32xf32> to vector<16x32xbf16>
    %cst_112 = arith.constant dense<0.000000e+00> : vector<16x64xf32>
    %345 = tpu.matmul %344, %210, %cst_112 {dimension_numbers = #tpu.dot_dimension_numbers<[1], [0], [0], [1], [0, 0, 1, 1], [], []>} : vector<16x32xbf16>, vector<32x64xbf16>, vector<16x64xf32> -> vector<16x64xf32>
    %346 = vector.broadcast %217 : vector<1x64xf32> to vector<16x64xf32>
    %347 = arith.addf %345, %346 : vector<16x64xf32>
    %cst_113 = arith.constant 5.000000e-01 : f32
    %348 = vector.broadcast %cst_113 : f32 to vector<16x64xf32>
    %349 = arith.mulf %348, %347 : vector<16x64xf32>
    %cst_114 = arith.constant 4.471500e-02 : f32
    %350 = vector.broadcast %cst_114 : f32 to vector<16x64xf32>
    %351 = arith.mulf %350, %347 : vector<16x64xf32>
    %352 = arith.mulf %351, %347 : vector<16x64xf32>
    %353 = arith.mulf %352, %347 : vector<16x64xf32>
    %354 = arith.addf %347, %353 : vector<16x64xf32>
    %cst_115 = arith.constant 0.797884583 : f32
    %355 = vector.broadcast %cst_115 : f32 to vector<16x64xf32>
    %356 = arith.mulf %355, %354 : vector<16x64xf32>
    %357 = math.tanh %356 : vector<16x64xf32>
    %cst_116 = arith.constant 1.000000e+00 : f32
    %358 = vector.broadcast %cst_116 : f32 to vector<16x64xf32>
    %359 = arith.addf %358, %357 : vector<16x64xf32>
    %360 = arith.mulf %349, %359 : vector<16x64xf32>
    %361 = arith.truncf %360 : vector<16x64xf32> to vector<16x64xbf16>
    %cst_117 = arith.constant dense<0.000000e+00> : vector<16x32xf32>
    %362 = tpu.matmul %361, %212, %cst_117 {dimension_numbers = #tpu.dot_dimension_numbers<[1], [0], [0], [1], [0, 0, 1, 1], [], []>} : vector<16x64xbf16>, vector<64x32xbf16>, vector<16x32xf32> -> vector<16x32xf32>
    %363 = vector.broadcast %218 : vector<1x32xf32> to vector<16x32xf32>
    %364 = arith.addf %362, %363 : vector<16x32xf32>
    %365 = arith.addf %343, %364 : vector<16x32xf32>
    %cst_118 = arith.constant dense<0.000000e+00> : vector<16xf32>
    %366 = vector.multi_reduction <add>, %365, %cst_118 [1] : vector<16x32xf32> to vector<16xf32>
    %367 = vector.shape_cast %366 : vector<16xf32> to vector<16x1xf32>
    %cst_119 = arith.constant 3.200000e+01 : f32
    %368 = vector.broadcast %cst_119 : f32 to vector<16x1xf32>
    %369 = arith.divf %367, %368 : vector<16x1xf32>
    %370 = vector.broadcast %369 : vector<16x1xf32> to vector<16x32xf32>
    %371 = arith.subf %365, %370 : vector<16x32xf32>
    %372 = arith.mulf %371, %371 : vector<16x32xf32>
    %cst_120 = arith.constant dense<0.000000e+00> : vector<16xf32>
    %373 = vector.multi_reduction <add>, %372, %cst_120 [1] : vector<16x32xf32> to vector<16xf32>
    %374 = vector.shape_cast %373 : vector<16xf32> to vector<16x1xf32>
    %cst_121 = arith.constant 3.200000e+01 : f32
    %375 = vector.broadcast %cst_121 : f32 to vector<16x1xf32>
    %376 = arith.divf %374, %375 : vector<16x1xf32>
    %cst_122 = arith.constant 9.99999996E-13 : f32
    %377 = vector.broadcast %cst_122 : f32 to vector<16x1xf32>
    %378 = arith.addf %376, %377 : vector<16x1xf32>
    %379 = math.rsqrt %378 : vector<16x1xf32>
    %380 = vector.broadcast %379 : vector<16x1xf32> to vector<16x32xf32>
    %381 = arith.mulf %371, %380 : vector<16x32xf32>
    %382 = vector.broadcast %221 : vector<1x32xf32> to vector<16x32xf32>
    %383 = arith.mulf %381, %382 : vector<16x32xf32>
    %384 = vector.broadcast %222 : vector<1x32xf32> to vector<16x32xf32>
    %385 = arith.addf %383, %384 : vector<16x32xf32>
    %386 = vector.extract_strided_slice %385 {offsets = [0, 0], sizes = [1, 32], strides = [1, 1]} : vector<16x32xf32> to vector<1x32xf32>
    %387 = vector.extract_strided_slice %385 {offsets = [8, 0], sizes = [1, 32], strides = [1, 1]} : vector<16x32xf32> to vector<1x32xf32>
    %388 = tpu.concatenate %386, %387 in 0 : vector<1x32xf32>, vector<1x32xf32> -> vector<2x32xf32>
    %389 = arith.truncf %388 : vector<2x32xf32> to vector<2x32xbf16>
    %c0_123 = arith.constant 0 : index
    %c0_124 = arith.constant 0 : index
    %390 = vector.load %arg9[%c0_123, %c0_124] : memref<32x128xbf16, #tpu.memory_space<vmem>>, vector<32x128xbf16>
    %cst_125 = arith.constant dense<0.000000e+00> : vector<2x128xf32>
    %391 = tpu.matmul %389, %390, %cst_125 {dimension_numbers = #tpu.dot_dimension_numbers<[1], [0], [0], [1], [0, 0, 1, 1], [], []>} : vector<2x32xbf16>, vector<32x128xbf16>, vector<2x128xf32> -> vector<2x128xf32>
    %c0_126 = arith.constant 0 : index
    %c0_127 = arith.constant 0 : index
    %392 = vector.load %arg10[%c0_126, %c0_127] : memref<1x128xf32, #tpu.memory_space<vmem>>, vector<1x128xf32>
    %393 = vector.broadcast %392 : vector<1x128xf32> to vector<2x128xf32>
    %394 = arith.addf %391, %393 : vector<2x128xf32>
    %c0_128 = arith.constant 0 : index
    %c0_129 = arith.constant 0 : index
    %395 = vector.load %arg11[%c0_128, %c0_129] : memref<2x128xf32, #tpu.memory_space<vmem>>, vector<2x128xf32>
    tpu.vector_store %arg11[%c0_128, %c0_129], %394 {strides = array<i32>} : memref<2x128xf32, #tpu.memory_space<vmem>>, vector<2x128xf32>,
    return
  }
  func.func @transform_0(%arg0: i32) -> (i32, i32, i32) {
    %c0_i32 = arith.constant 0 : i32
    %c0_i32_0 = arith.constant 0 : i32
    %c0_i32_1 = arith.constant 0 : i32
    return %arg0, %c0_i32, %c0_i32_0 : i32, i32, i32
  }
  func.func @transform_1(%arg0: i32) -> (i32, i32) {
    %c0_i32 = arith.constant 0 : i32
    %c0_i32_0 = arith.constant 0 : i32
    return %arg0, %c0_i32 : i32, i32
  }
  func.func @transform_2(%arg0: i32) -> (i32, i32) {
    %c0_i32 = arith.constant 0 : i32
    %c0_i32_0 = arith.constant 0 : i32
    %c0_i32_1 = arith.constant 0 : i32
    return %c0_i32, %c0_i32_0 : i32, i32
  }
  func.func @transform_3(%arg0: i32) -> (i32, i32, i32) {
    %c0_i32 = arith.constant 0 : i32
    %c0_i32_0 = arith.constant 0 : i32
    %c0_i32_1 = arith.constant 0 : i32
    %c0_i32_2 = arith.constant 0 : i32
    return %c0_i32, %c0_i32_0, %c0_i32_1 : i32, i32, i32
  }
  func.func @transform_4(%arg0: i32) -> (i32, i32, i32) {
    %c0_i32 = arith.constant 0 : i32
    %c0_i32_0 = arith.constant 0 : i32
    %c0_i32_1 = arith.constant 0 : i32
    %c0_i32_2 = arith.constant 0 : i32
    return %c0_i32, %c0_i32_0, %c0_i32_1 : i32, i32, i32
  }
  func.func @transform_5(%arg0: i32) -> (i32, i32, i32) {
    %c0_i32 = arith.constant 0 : i32
    %c0_i32_0 = arith.constant 0 : i32
    %c0_i32_1 = arith.constant 0 : i32
    %c0_i32_2 = arith.constant 0 : i32
    return %c0_i32, %c0_i32_0, %c0_i32_1 : i32, i32, i32
  }
  func.func @transform_6(%arg0: i32) -> (i32, i32, i32) {
    %c0_i32 = arith.constant 0 : i32
    %c0_i32_0 = arith.constant 0 : i32
    %c0_i32_1 = arith.constant 0 : i32
    %c0_i32_2 = arith.constant 0 : i32
    return %c0_i32, %c0_i32_0, %c0_i32_1 : i32, i32, i32
  }
  func.func @transform_7(%arg0: i32) -> (i32, i32, i32) {
    %c0_i32 = arith.constant 0 : i32
    %c0_i32_0 = arith.constant 0 : i32
    %c0_i32_1 = arith.constant 0 : i32
    %c0_i32_2 = arith.constant 0 : i32
    return %c0_i32, %c0_i32_0, %c0_i32_1 : i32, i32, i32
  }
  func.func @transform_8(%arg0: i32) -> (i32, i32) {
    %c0_i32 = arith.constant 0 : i32
    %c0_i32_0 = arith.constant 0 : i32
    %c0_i32_1 = arith.constant 0 : i32
    return %c0_i32, %c0_i32_0 : i32, i32
  }
  func.func @transform_9(%arg0: i32) -> (i32, i32) {
    %c0_i32 = arith.constant 0 : i32
    %c0_i32_0 = arith.constant 0 : i32
    %c0_i32_1 = arith.constant 0 : i32
    return %c0_i32, %c0_i32_0 : i32, i32
  }
  func.func @transform_10(%arg0: i32) -> (i32, i32) {
    %c0_i32 = arith.constant 0 : i32
    %c0_i32_0 = arith.constant 0 : i32
    return %arg0, %c0_i32 : i32, i32
  }
}

</mosaic_0001>

<llo_original>
// kernel: tpu_custom_call.1
$region0: #{tpu_custom_call.1}
  #allocation0 [shape = 'u32[]', space=smem, size = 0x4, offset = 0x4, fixed_abs, tag = 'smem constant byte address 0x4 - core index']
  #allocation1 [shape = 'u32[72,128]{1,0:T(1,128)}', space=vmem, size = 0x9000, scoped, tag = 'internal scratch']
  %s0 = inlined_call_operand.hbm [shape: f32[2,8,32], index: 0, kind: input, shape index: {}]
  %s1 = inlined_call_operand.hbm [shape: f32[2,8], index: 1, kind: input, shape index: {}]
  %s2 = inlined_call_operand.hbm [shape: f32[2,32], index: 2, kind: input, shape index: {}]
  %s3 = inlined_call_operand.vmem [shape: bf16[2,32,96], index: 3, kind: input, shape index: {}]
  %s4 = inlined_call_operand.vmem [shape: bf16[2,32,32], index: 4, kind: input, shape index: {}]
  %s5 = inlined_call_operand.vmem [shape: bf16[2,32,64], index: 5, kind: input, shape index: {}]
  %s6 = inlined_call_operand.vmem [shape: bf16[2,64,32], index: 6, kind: input, shape index: {}]
  %s7 = inlined_call_operand.hbm [shape: f32[2,8,96], index: 7, kind: input, shape index: {}]
  %s8 = inlined_call_operand.hbm [shape: bf16[32,128], index: 8, kind: input, shape index: {}]
  %s9 = inlined_call_operand.vmem [shape: f32[1,128], index: 9, kind: input, shape index: {}]
  %s10 = inlined_call_operand.hbm [shape: f32[2,128], index: 10, kind: output, shape index: {}]
  %s11 = sld [smem:[#allocation0]]
  $region70: #{tpu_custom_call.1} parent=0
    _
  %s13 = ssub.s32 1, %s11
  %s14 = scalar_select 0, %s13, %s11
  $region1: #{tpu_custom_call.1} parent=0
    #allocation2 [shape = 'u8[8192]{0}', space=vmem, size = 0x2000, scoped, tag = 'input window, operand 0, single buffered']
    #allocation3 [shape = 's32[1]{0}', space=sflag, size = 0x4, scoped, tag = 'scoped memory for tpu_custom_call.1']
    #allocation4 [shape = 's32[1]{0}', space=sflag, size = 0x4, scoped, tag = 'scoped memory for tpu_custom_call.1']
    #allocation5 [shape = 'u8[1024]{0}', space=vmem, size = 0x400, scoped, tag = 'input window, operand 1, single buffered']
    #allocation6 [shape = 's32[1]{0}', space=sflag, size = 0x4, scoped, tag = 'scoped memory for tpu_custom_call.1']
    #allocation7 [shape = 'u8[1024]{0}', space=vmem, size = 0x400, scoped, tag = 'input window, operand 2, single buffered']
    #allocation8 [shape = 'u8[8192]{0}', space=vmem, size = 0x2000, scoped, tag = 'input window, operand 7, single buffered']
    #allocation9 [shape = 's32[1]{0}', space=sflag, size = 0x4, scoped, tag = 'scoped memory for tpu_custom_call.1']
    #allocation10 [shape = 'u8[8192]{0}', space=vmem, size = 0x2000, scoped, tag = 'input window, operand 8, single buffered']
    #allocation11 [shape = 'u8[1024]{0}', space=vmem, size = 0x400, scoped, tag = 'output window, operand 0, single buffered']
    %15 = vsyncpa [#allocation3], 0
    %16 = vsyncpa [#allocation6], 0
    %17 = vsyncpa [#allocation9], 0
    %18 = vsyncpa [#allocation4], 0
    // Predicated region
    $region2: #{tpu_custom_call.1} parent=1 // pred_check
      _
    $region3: #{tpu_custom_call.1} parent=1 // pred_check_branch
      %20 = sbr.rel (0) target = $region5
    $region4: #{tpu_custom_call.1} parent=1 // pred_region
      %22 = vsyncadd [#allocation3], 0
      %s23 = sshll.u32 %s0, 4
      %s24 = int_to_ptr.hbm [resolvable:$true] %s23
      %s25 = sshll.u32 [#allocation2], 4
      %s26 = int_to_ptr.vmem [resolvable:$true] %s25
      %31 = dma.hbm_to_vmem [thread:$0]  %s24, 256, %s26, [#allocation3], 128, 128, 8
    $region5: #{tpu_custom_call.1} parent=1 // pred_fallthru
      _
    // Predicated region
    $region6: #{tpu_custom_call.1} parent=1 // pred_check
      _
    $region7: #{tpu_custom_call.1} parent=1 // pred_check_branch
      %33 = sbr.rel (0) target = $region9
    $region8: #{tpu_custom_call.1} parent=1 // pred_region
      %35 = vsyncadd [#allocation6], 0
      %s37 = sshll.u32 %s1, 4
      %s38 = int_to_ptr.hbm [resolvable:$true] %s37
      %s39 = sshll.u32 [#allocation5], 4
      %s40 = int_to_ptr.vmem [resolvable:$true] %s39
      %42 = dma.hbm_to_vmem [thread:$0]  %s38, 32, %s40, [#allocation6]
    $region9: #{tpu_custom_call.1} parent=1 // pred_fallthru
      _
    // Predicated region
    $region10: #{tpu_custom_call.1} parent=1 // pred_check
      _
    $region11: #{tpu_custom_call.1} parent=1 // pred_check_branch
      %44 = sbr.rel (0) target = $region13
    $region12: #{tpu_custom_call.1} parent=1 // pred_region
      %46 = vsyncadd [#allocation6], 0
      %s48 = sshll.u32 %s2, 4
      %s49 = int_to_ptr.hbm [resolvable:$true] %s48
      %s50 = sshll.u32 [#allocation7], 4
      %s51 = int_to_ptr.vmem [resolvable:$true] %s50
      %53 = dma.hbm_to_vmem [thread:$0]  %s49, 32, %s51, [#allocation6]
    $region13: #{tpu_custom_call.1} parent=1 // pred_fallthru
      _
    // Predicated region
    $region14: #{tpu_custom_call.1} parent=1 // pred_check
      _
    $region15: #{tpu_custom_call.1} parent=1 // pred_check_branch
      %55 = sbr.rel (0) target = $region17
    $region16: #{tpu_custom_call.1} parent=1 // pred_region
      _
    $region17: #{tpu_custom_call.1} parent=1 // pred_fallthru
      _
    // Predicated region
    $region18: #{tpu_custom_call.1} parent=1 // pred_check
      _
    $region19: #{tpu_custom_call.1} parent=1 // pred_check_branch
      %57 = sbr.rel (0) target = $region21
    $region20: #{tpu_custom_call.1} parent=1 // pred_region
      _
    $region21: #{tpu_custom_call.1} parent=1 // pred_fallthru
      _
    // Predicated region
    $region22: #{tpu_custom_call.1} parent=1 // pred_check
      _
    $region23: #{tpu_custom_call.1} parent=1 // pred_check_branch
      %59 = sbr.rel (0) target = $region25
    $region24: #{tpu_custom_call.1} parent=1 // pred_region
      _
    $region25: #{tpu_custom_call.1} parent=1 // pred_fallthru
      _
    // Predicated region
    $region26: #{tpu_custom_call.1} parent=1 // pred_check
      _
    $region27: #{tpu_custom_call.1} parent=1 // pred_check_branch
      %61 = sbr.rel (0) target = $region29
    $region28: #{tpu_custom_call.1} parent=1 // pred_region
      _
    $region29: #{tpu_custom_call.1} parent=1 // pred_fallthru
      _
    // Predicated region
    $region30: #{tpu_custom_call.1} parent=1 // pred_check
      _
    $region31: #{tpu_custom_call.1} parent=1 // pred_check_branch
      %63 = sbr.rel (0) target = $region33
    $region32: #{tpu_custom_call.1} parent=1 // pred_region
      %65 = vsyncadd [#allocation9], 0
      %s66 = sshll.u32 %s7, 4
      %s67 = int_to_ptr.hbm [resolvable:$true] %s66
      %s68 = sshll.u32 [#allocation8], 4
      %s69 = int_to_ptr.vmem [resolvable:$true] %s68
      %74 = dma.hbm_to_vmem [thread:$0]  %s67, 256, %s69, [#allocation9], 128, 128, 8
    $region33: #{tpu_custom_call.1} parent=1 // pred_fallthru
      _
    // Predicated region
    $region34: #{tpu_custom_call.1} parent=1 // pred_check
      _
    $region35: #{tpu_custom_call.1} parent=1 // pred_check_branch
      %76 = sbr.rel (0) target = $region37
    $region36: #{tpu_custom_call.1} parent=1 // pred_region
      %78 = vsyncadd [#allocation9], 0
      %s79 = sshll.u32 %s8, 4
      %s80 = int_to_ptr.hbm [resolvable:$true] %s79
      %s81 = sshll.u32 [#allocation10], 4
      %s82 = int_to_ptr.vmem [resolvable:$true] %s81
      %87 = dma.hbm_to_vmem [thread:$0]  %s80, 256, %s82, [#allocation9], 64, 64, 4
    $region37: #{tpu_custom_call.1} parent=1 // pred_fallthru
      _
    // Predicated region
    $region38: #{tpu_custom_call.1} parent=1 // pred_check
      _
    $region39: #{tpu_custom_call.1} parent=1 // pred_check_branch
      %89 = sbr.rel (0) target = $region41
    $region40: #{tpu_custom_call.1} parent=1 // pred_region
      _
    $region41: #{tpu_custom_call.1} parent=1 // pred_fallthru
      _
    // Predicated region
    $region42: #{tpu_custom_call.1} parent=1 // pred_check
      _
    $region43: #{tpu_custom_call.1} parent=1 // pred_check_branch
      %91 = sbr.rel (0) target = $region45
    $region44: #{tpu_custom_call.1} parent=1 // pred_region
      %93 = dma.done [#allocation3], 256
    $region45: #{tpu_custom_call.1} parent=1 // pred_fallthru
      _
    // Predicated region
    $region46: #{tpu_custom_call.1} parent=1 // pred_check
      _
    $region47: #{tpu_custom_call.1} parent=1 // pred_check_branch
      %95 = sbr.rel (0) target = $region49
    $region48: #{tpu_custom_call.1} parent=1 // pred_region
      %97 = dma.done [#allocation6], 32
    $region49: #{tpu_custom_call.1} parent=1 // pred_fallthru
      _
    // Predicated region
    $region50: #{tpu_custom_call.1} parent=1 // pred_check
      _
    $region51: #{tpu_custom_call.1} parent=1 // pred_check_branch
      %99 = sbr.rel (0) target = $region53
    $region52: #{tpu_custom_call.1} parent=1 // pred_region
      %101 = dma.done [#allocation6], 32
    $region53: #{tpu_custom_call.1} parent=1 // pred_fallthru
      _
    // Predicated region
    $region54: #{tpu_custom_call.1} parent=1 // pred_check
      _
    $region55: #{tpu_custom_call.1} parent=1 // pred_check_branch
      %103 = sbr.rel (0) target = $region57
    $region56: #{tpu_custom_call.1} parent=1 // pred_region
      %105 = dma.done [#allocation9], 256
    $region57: #{tpu_custom_call.1} parent=1 // pred_fallthru
      _
    // Predicated region
    $region58: #{tpu_custom_call.1} parent=1 // pred_check
      _
    $region59: #{tpu_custom_call.1} parent=1 // pred_check_branch
      %107 = sbr.rel (0) target = $region61
    $region60: #{tpu_custom_call.1} parent=1 // pred_region
      %109 = dma.done [#allocation9], 256
    $region61: #{tpu_custom_call.1} parent=1 // pred_fallthru
      _
    %v111 = vld [vmem:[#allocation2] sm:$0xff]
    %v112 = vld [vmem:[#allocation2 + $0x8] sm:$0xff]
    %v113 = vld [vmem:[#allocation7] sm:$0x1]
    %v114 = vld [vmem:[#allocation7 + $0x1] sm:$0x1]
    %vm115 = vcmask 261120
    %v116 = vsel %vm115, %v111, 0.0
    %117 = vadd.xlane.f32.xlu0 %v116
    %v118 = vpop.xlane.xlu0 %117
    %v119 = vsel %vm115, %v112, 0.0
    %120 = vadd.xlane.f32.xlu0 %v119
    %v121 = vpop.xlane.xlu0 %120
    %v122 = vrcp.pop 32.0
    %v123 = vmul.f32 32.0, %v122
    %v124 = vsub.f32 1.0, %v123
    %v125 = vmul.f32 %v122, %v124
    %v126 = vadd.f32 %v122, %v125
    %vm127 = vweird.f32 %v122
    %v128 = vsel %vm127, %v122, %v126
    %v129 = vmul.f32 %v118, %v128
    %v130 = vmul.f32 %v121, %v128
    %v131 = vsub.f32 %v111, %v129
    %v132 = vsub.f32 %v112, %v130
    %v133 = vmul.f32 %v131, %v131
    %v134 = vmul.f32 %v132, %v132
    %v135 = vsel %vm115, %v133, 0.0
    %136 = vadd.xlane.f32.xlu0 %v135
    %v137 = vpop.xlane.xlu0 %136
    %v138 = vsel %vm115, %v134, 0.0
    %139 = vadd.xlane.f32.xlu0 %v138
    %v140 = vpop.xlane.xlu0 %139
    %v141 = vmul.f32 %v137, %v128
    %v142 = vmul.f32 %v140, %v128
    %v143 = vadd.f32 %v141, 1e-12
    %v144 = vadd.f32 %v142, 1e-12
    %v145 = vrsqrt.pop %v143
    %v146 = vmul.f32 %v145, %v143
    %v147 = vmul.f32 %v146, %v145
    %v148 = vmul.f32 0.5, %v147
    %v149 = vsub.f32 1.5, %v148
    %v150 = vmul.f32 %v145, %v149
    %vm151 = vweird.f32 %v143
    %vm152 = vweird.f32 %v145
    %vm153 = vmor %vm151, %vm152
    %v154 = vsel %vm153, %v145, %v150
    %v155 = vrsqrt.pop %v144
    %v156 = vmul.f32 %v155, %v144
    %v157 = vmul.f32 %v156, %v155
    %v158 = vmul.f32 0.5, %v157
    %v159 = vsub.f32 1.5, %v158
    %v160 = vmul.f32 %v155, %v159
    %vm161 = vweird.f32 %v144
    %vm162 = vweird.f32 %v155
    %vm163 = vmor %vm161, %vm162
    %v164 = vsel %vm163, %v155, %v160
    %v165 = vmul.f32 %v131, %v154
    %v166 = vmul.f32 %v132, %v164
    %v167 = vperm.slane %v113, 0
    %v168 = vmul.f32 %v165, %v167
    %v169 = vmul.f32 %v166, %v167
    %v170 = vperm.slane %v114, 0
    %v171 = vadd.f32 %v168, %v170
    %v172 = vadd.f32 %v169, %v170
    %v173 = vld [vmem:[%s3] sm:$0xf]
    %v174 = vld [vmem:[%s3 + $0x4] sm:$0xf]
    %v175 = vld [vmem:[%s3 + $0x8] sm:$0xf]
    %v176 = vld [vmem:[%s3 + $0xc] sm:$0xf]
    %v177 = vld [vmem:[%s4] sm:$0xf]
    %v178 = vld [vmem:[%s4 + $0x4] sm:$0xf]
    %v179 = vld [vmem:[%s4 + $0x8] sm:$0xf]
    %v180 = vld [vmem:[%s4 + $0xc] sm:$0xf]
    %v181 = vld [vmem:[%s5] sm:$0xf]
    %v182 = vld [vmem:[%s5 + $0x4] sm:$0xf]
    %v183 = vld [vmem:[%s5 + $0x8] sm:$0xf]
    %v184 = vld [vmem:[%s5 + $0xc] sm:$0xf]
    %v185 = vld [vmem:[%s6] sm:$0xf]
    %v186 = vld [vmem:[%s6 + $0x4] sm:$0xf]
    %v187 = vld [vmem:[%s6 + $0x8] sm:$0xf]
    %v188 = vld [vmem:[%s6 + $0xc] sm:$0xf]
    %v189 = vld [vmem:[%s6 + $0x10] sm:$0xf]
    %v190 = vld [vmem:[%s6 + $0x14] sm:$0xf]
    %v191 = vld [vmem:[%s6 + $0x18] sm:$0xf]
    %v192 = vld [vmem:[%s6 + $0x1c] sm:$0xf]
    %v193 = vld [vmem:[#allocation8] sm:$0xff]
    %v194 = vpack.c.bf16 %v172, %v171
    %v195 = vperm.slane %v193, 0
    %v200 = vunpack.c.l.b16 %v173
    %v201 = vunpack.c.l.b16 %v174
    %v202 = vunpack.c.l.b16 %v175
    %v203 = vunpack.c.l.b16 %v176
    %v204 = vpack.c.b16 %v201, %v200
    %v205 = vpack.c.b16 %v203, %v202
    %v209 = vsel %vm115, %v194, 0
    %211 = vmatpush.bf16.msra.mxu0 0
    %212 = vmatpush.bf16.msra.mxu0 0
    %213 = vmatpush.bf16.msra.mxu0 0
    %214 = vmatpush.bf16.msra.mxu0 0
    %215 = vmatpush.bf16.msra.mxu0 0
    %216 = vmatpush.bf16.msra.mxu0 0
    %217 = vmatpush.bf16.msra.mxu0 %v205
    %218 = vmatpush.bf16.msra.mxu0 %v204
    %219 = vmatmul.bf16.gmra.mxu0 %v209
    %v220 = vpop.f32.mrf.mxu0
    %v221 = vadd.f32 %v195, %v220
    %v222 = vpop.f32.mrf.mxu0
    %v223 = vadd.f32 %v195, %v222
    %224 = vdwg.mxu0
    %v225 = vpack.c.bf16 %v221, %v221
    %v226 = vpack.c.bf16 %v223, %v223
    %v227 = vld [vmem:[#allocation5] sm:$0x1]
    %v229 = vunpack.c.l.b16 %v225
    %v230 = vpack.c.b16 %v229, %v229
    %231 = vrot.lane.b32.xlu0 %v230, 112
    %v232 = vpop.permute.xlu0 %231
    %vm233 = vcmask 130048
    %v235 = vsel %vm233, %v225, 0
    %v238 = vsel %vm233, %v232, 0
    %240 = vmatpush.bf16.xpose.msra.mxu0 0
    %241 = vmatpush.bf16.xpose.msra.mxu0 0
    %242 = vmatpush.bf16.xpose.msra.mxu0 0
    %243 = vmatpush.bf16.xpose.msra.mxu0 0
    %244 = vmatpush.bf16.xpose.msra.mxu0 0
    %245 = vmatpush.bf16.xpose.msra.mxu0 0
    %246 = vmatpush.bf16.xpose.msra.mxu0 0
    %247 = vmatpush.bf16.xpose.msra.mxu0 %v238
    %248 = vmatmul.bf16.gmra.mxu0 %v235
    %v249 = vpop.f32.mrf.mxu0
    %v250 = vadd.f32 0.0, %v249
    %v251 = vpop.f32.mrf.mxu0
    %252 = vdwg.mxu0
    %v253 = vmul.f32 %v250, 0.25
    %v254 = vperm.slane %v227, 0
    %v255 = vadd.f32 %v253, %v254
    %vm256 = vcmask 64512
    %v257 = vsel %vm256, %v255, -inf
    %258 = vmax.xlane.f32.xlu0 %v257
    %v259 = vpop.xlane.xlu0 %258
    %v260 = vsub.f32 %v255, %v259
    %v261 = vmul.f32 %v260, 1.442695
    %v262 = vpow.pop %v261
    %v263 = vsel %vm256, %v262, 0.0
    %264 = vadd.xlane.f32.xlu0 %v263
    %v265 = vpop.xlane.xlu0 %264
    %v266 = vrcp.pop %v265
    %v267 = vmul.f32 %v262, %v266
    %v268 = vpack.c.bf16 %v267, %v267
    %269 = vrot.lane.b32.xlu0 %v230, 96
    %v270 = vpop.permute.xlu0 %269
    %v272 = vsel %vm256, %v268, 0
    %vm274 = vcmask 1043456
    %v276 = vsel %vm274, %v270, 0
    %278 = vmatpush.bf16.msra.mxu0 0
    %279 = vmatpush.bf16.msra.mxu0 0
    %280 = vmatpush.bf16.msra.mxu0 0
    %281 = vmatpush.bf16.msra.mxu0 0
    %282 = vmatpush.bf16.msra.mxu0 0
    %283 = vmatpush.bf16.msra.mxu0 0
    %284 = vmatpush.bf16.msra.mxu0 0
    %285 = vmatpush.bf16.msra.mxu0 %v276
    %286 = vmatmul.bf16.gmra.mxu0 %v272
    %v287 = vpop.f32.mrf.mxu0
    %v288 = vadd.f32 0.0, %v287
    %v289 = vpop.f32.mrf.mxu0
    %290 = vdwg.mxu0
    %291 = vrot.lane.b32.xlu0 %v230, 80
    %v292 = vpop.permute.xlu0 %291
    %293 = vrot.lane.b32.xlu0 %v230, 64
    %v294 = vpop.permute.xlu0 %293
    %v296 = vsel %vm233, %v292, 0
    %v299 = vsel %vm233, %v294, 0
    %301 = vmatpush.bf16.xpose.msra.mxu0 0
    %302 = vmatpush.bf16.xpose.msra.mxu0 0
    %303 = vmatpush.bf16.xpose.msra.mxu0 0
    %304 = vmatpush.bf16.xpose.msra.mxu0 0
    %305 = vmatpush.bf16.xpose.msra.mxu0 0
    %306 = vmatpush.bf16.xpose.msra.mxu0 0
    %307 = vmatpush.bf16.xpose.msra.mxu0 0
    %308 = vmatpush.bf16.xpose.msra.mxu0 %v299
    %309 = vmatmul.bf16.gmra.mxu0 %v296
    %v310 = vpop.f32.mrf.mxu0
    %v311 = vadd.f32 0.0, %v310
    %v312 = vpop.f32.mrf.mxu0
    %313 = vdwg.mxu0
    %v314 = vmul.f32 %v311, 0.25
    %v315 = vadd.f32 %v314, %v254
    %v316 = vsel %vm256, %v315, -inf
    %317 = vmax.xlane.f32.xlu0 %v316
    %v318 = vpop.xlane.xlu0 %317
    %v319 = vsub.f32 %v315, %v318
    %v320 = vmul.f32 %v319, 1.442695
    %v321 = vpow.pop %v320
    %v322 = vsel %vm256, %v321, 0.0
    %323 = vadd.xlane.f32.xlu0 %v322
    %v324 = vpop.xlane.xlu0 %323
    %v325 = vrcp.pop %v324
    %v326 = vmul.f32 %v321, %v325
    %v327 = vpack.c.bf16 %v326, %v326
    %328 = vrot.lane.b32.xlu0 %v230, 48
    %v329 = vpop.permute.xlu0 %328
    %v331 = vsel %vm256, %v327, 0
    %v334 = vsel %vm274, %v329, 0
    %336 = vmatpush.bf16.msra.mxu0 0
    %337 = vmatpush.bf16.msra.mxu0 0
    %338 = vmatpush.bf16.msra.mxu0 0
    %339 = vmatpush.bf16.msra.mxu0 0
    %340 = vmatpush.bf16.msra.mxu0 0
    %341 = vmatpush.bf16.msra.mxu0 0
    %342 = vmatpush.bf16.msra.mxu0 0
    %343 = vmatpush.bf16.msra.mxu0 %v334
    %344 = vmatmul.bf16.gmra.mxu0 %v331
    %v345 = vpop.f32.mrf.mxu0
    %v346 = vadd.f32 0.0, %v345
    %v347 = vpop.f32.mrf.mxu0
    %348 = vdwg.mxu0
    %350 = vrot.lane.b32.xlu0 %v346, 16
    %v351 = vpop.permute.xlu0 %350
    %v353 = vsel %vm233, %v288, %v351
    %v354 = vld [vmem:[#allocation5 + $0x1] sm:$0x1]
    %v356 = vunpack.c.l.b16 %v226
    %v357 = vpack.c.b16 %v356, %v356
    %358 = vrot.lane.b32.xlu0 %v357, 112
    %v359 = vpop.permute.xlu0 %358
    %v361 = vsel %vm233, %v226, 0
    %v364 = vsel %vm233, %v359, 0
    %366 = vmatpush.bf16.xpose.msra.mxu0 0
    %367 = vmatpush.bf16.xpose.msra.mxu0 0
    %368 = vmatpush.bf16.xpose.msra.mxu0 0
    %369 = vmatpush.bf16.xpose.msra.mxu0 0
    %370 = vmatpush.bf16.xpose.msra.mxu0 0
    %371 = vmatpush.bf16.xpose.msra.mxu0 0
    %372 = vmatpush.bf16.xpose.msra.mxu0 0
    %373 = vmatpush.bf16.xpose.msra.mxu0 %v364
    %374 = vmatmul.bf16.gmra.mxu0 %v361
    %v375 = vpop.f32.mrf.mxu0
    %v376 = vadd.f32 0.0, %v375
    %v377 = vpop.f32.mrf.mxu0
    %378 = vdwg.mxu0
    %v379 = vmul.f32 %v376, 0.25
    %v380 = vperm.slane %v354, 0
    %v381 = vadd.f32 %v379, %v380
    %v382 = vsel %vm256, %v381, -inf
    %383 = vmax.xlane.f32.xlu0 %v382
    %v384 = vpop.xlane.xlu0 %383
    %v385 = vsub.f32 %v381, %v384
    %v386 = vmul.f32 %v385, 1.442695
    %v387 = vpow.pop %v386
    %v388 = vsel %vm256, %v387, 0.0
    %389 = vadd.xlane.f32.xlu0 %v388
    %v390 = vpop.xlane.xlu0 %389
    %v391 = vrcp.pop %v390
    %v392 = vmul.f32 %v387, %v391
    %v393 = vpack.c.bf16 %v392, %v392
    %394 = vrot.lane.b32.xlu0 %v357, 96
    %v395 = vpop.permute.xlu0 %394
    %v397 = vsel %vm256, %v393, 0
    %v400 = vsel %vm274, %v395, 0
    %402 = vmatpush.bf16.msra.mxu0 0
    %403 = vmatpush.bf16.msra.mxu0 0
    %404 = vmatpush.bf16.msra.mxu0 0
    %405 = vmatpush.bf16.msra.mxu0 0
    %406 = vmatpush.bf16.msra.mxu0 0
    %407 = vmatpush.bf16.msra.mxu0 0
    %408 = vmatpush.bf16.msra.mxu0 0
    %409 = vmatpush.bf16.msra.mxu0 %v400
    %410 = vmatmul.bf16.gmra.mxu0 %v397
    %v411 = vpop.f32.mrf.mxu0
    %v412 = vadd.f32 0.0, %v411
    %v413 = vpop.f32.mrf.mxu0
    %414 = vdwg.mxu0
    %415 = vrot.lane.b32.xlu0 %v357, 80
    %v416 = vpop.permute.xlu0 %415
    %417 = vrot.lane.b32.xlu0 %v357, 64
    %v418 = vpop.permute.xlu0 %417
    %v420 = vsel %vm233, %v416, 0
    %v423 = vsel %vm233, %v418, 0
    %425 = vmatpush.bf16.xpose.msra.mxu0 0
    %426 = vmatpush.bf16.xpose.msra.mxu0 0
    %427 = vmatpush.bf16.xpose.msra.mxu0 0
    %428 = vmatpush.bf16.xpose.msra.mxu0 0
    %429 = vmatpush.bf16.xpose.msra.mxu0 0
    %430 = vmatpush.bf16.xpose.msra.mxu0 0
    %431 = vmatpush.bf16.xpose.msra.mxu0 0
    %432 = vmatpush.bf16.xpose.msra.mxu0 %v423
    %433 = vmatmul.bf16.gmra.mxu0 %v420
    %v434 = vpop.f32.mrf.mxu0
    %v435 = vadd.f32 0.0, %v434
    %v436 = vpop.f32.mrf.mxu0
    %437 = vdwg.mxu0
    %v438 = vmul.f32 %v435, 0.25
    %v439 = vadd.f32 %v438, %v380
    %v440 = vsel %vm256, %v439, -inf
    %441 = vmax.xlane.f32.xlu0 %v440
    %v442 = vpop.xlane.xlu0 %441
    %v443 = vsub.f32 %v439, %v442
    %v444 = vmul.f32 %v443, 1.442695
    %v445 = vpow.pop %v444
    %v446 = vsel %vm256, %v445, 0.0
    %447 = vadd.xlane.f32.xlu0 %v446
    %v448 = vpop.xlane.xlu0 %447
    %v449 = vrcp.pop %v448
    %v450 = vmul.f32 %v445, %v449
    %v451 = vpack.c.bf16 %v450, %v450
    %452 = vrot.lane.b32.xlu0 %v357, 48
    %v453 = vpop.permute.xlu0 %452
    %v455 = vsel %vm256, %v451, 0
    %v458 = vsel %vm274, %v453, 0
    %460 = vmatpush.bf16.msra.mxu0 0
    %461 = vmatpush.bf16.msra.mxu0 0
    %462 = vmatpush.bf16.msra.mxu0 0
    %463 = vmatpush.bf16.msra.mxu0 0
    %464 = vmatpush.bf16.msra.mxu0 0
    %465 = vmatpush.bf16.msra.mxu0 0
    %466 = vmatpush.bf16.msra.mxu0 0
    %467 = vmatpush.bf16.msra.mxu0 %v458
    %468 = vmatmul.bf16.gmra.mxu0 %v455
    %v469 = vpop.f32.mrf.mxu0
    %v470 = vadd.f32 0.0, %v469
    %v471 = vpop.f32.mrf.mxu0
    %472 = vdwg.mxu0
    %474 = vrot.lane.b32.xlu0 %v470, 16
    %v475 = vpop.permute.xlu0 %474
    %v477 = vsel %vm233, %v412, %v475
    %v478 = vpack.c.bf16 %v477, %v353
    %v479 = vperm.slane %v193, 1
    %v484 = vunpack.c.l.b16 %v177
    %v485 = vunpack.c.l.b16 %v178
    %v486 = vunpack.c.l.b16 %v179
    %v487 = vunpack.c.l.b16 %v180
    %v488 = vpack.c.b16 %v485, %v484
    %v489 = vpack.c.b16 %v487, %v486
    %v493 = vsel %vm115, %v478, 0
    %495 = vmatpush.bf16.msra.mxu0 0
    %496 = vmatpush.bf16.msra.mxu0 0
    %497 = vmatpush.bf16.msra.mxu0 0
    %498 = vmatpush.bf16.msra.mxu0 0
    %499 = vmatpush.bf16.msra.mxu0 0
    %500 = vmatpush.bf16.msra.mxu0 0
    %501 = vmatpush.bf16.msra.mxu0 %v489
    %502 = vmatpush.bf16.msra.mxu0 %v488
    %503 = vmatmul.bf16.gmra.mxu0 %v493
    %v504 = vpop.f32.mrf.mxu0
    %v505 = vadd.f32 %v479, %v504
    %v506 = vpop.f32.mrf.mxu0
    %v507 = vadd.f32 %v479, %v506
    %508 = vdwg.mxu0
    %v509 = vadd.f32 %v171, %v505
    %v510 = vadd.f32 %v172, %v507
    %v511 = vsel %vm115, %v509, 0.0
    %512 = vadd.xlane.f32.xlu0 %v511
    %v513 = vpop.xlane.xlu0 %512
    %v514 = vsel %vm115, %v510, 0.0
    %515 = vadd.xlane.f32.xlu0 %v514
    %v516 = vpop.xlane.xlu0 %515
    %v517 = vmul.f32 %v513, %v128
    %v518 = vmul.f32 %v516, %v128
    %v519 = vsub.f32 %v509, %v517
    %v520 = vsub.f32 %v510, %v518
    %v521 = vmul.f32 %v519, %v519
    %v522 = vmul.f32 %v520, %v520
    %v523 = vsel %vm115, %v521, 0.0
    %524 = vadd.xlane.f32.xlu0 %v523
    %v525 = vpop.xlane.xlu0 %524
    %v526 = vsel %vm115, %v522, 0.0
    %527 = vadd.xlane.f32.xlu0 %v526
    %v528 = vpop.xlane.xlu0 %527
    %v529 = vmul.f32 %v525, %v128
    %v530 = vmul.f32 %v528, %v128
    %v531 = vadd.f32 %v529, 1e-12
    %v532 = vadd.f32 %v530, 1e-12
    %v533 = vrsqrt.pop %v531
    %v534 = vmul.f32 %v533, %v531
    %v535 = vmul.f32 %v534, %v533
    %v536 = vmul.f32 0.5, %v535
    %v537 = vsub.f32 1.5, %v536
    %v538 = vmul.f32 %v533, %v537
    %vm539 = vweird.f32 %v531
    %vm540 = vweird.f32 %v533
    %vm541 = vmor %vm539, %vm540
    %v542 = vsel %vm541, %v533, %v538
    %v543 = vrsqrt.pop %v532
    %v544 = vmul.f32 %v543, %v532
    %v545 = vmul.f32 %v544, %v543
    %v546 = vmul.f32 0.5, %v545
    %v547 = vsub.f32 1.5, %v546
    %v548 = vmul.f32 %v543, %v547
    %vm549 = vweird.f32 %v532
    %vm550 = vweird.f32 %v543
    %vm551 = vmor %vm549, %vm550
    %v552 = vsel %vm551, %v543, %v548
    %v553 = vmul.f32 %v519, %v542
    %v554 = vmul.f32 %v520, %v552
    %v555 = vperm.slane %v193, 4
    %v556 = vmul.f32 %v553, %v555
    %v557 = vmul.f32 %v554, %v555
    %v558 = vperm.slane %v193, 5
    %v559 = vadd.f32 %v556, %v558
    %v560 = vadd.f32 %v557, %v558
    %v561 = vpack.c.bf16 %v560, %v559
    %v562 = vperm.slane %v193, 2
    %v567 = vunpack.c.l.b16 %v181
    %v568 = vunpack.c.l.b16 %v182
    %v569 = vunpack.c.l.b16 %v183
    %v570 = vunpack.c.l.b16 %v184
    %v571 = vpack.c.b16 %v568, %v567
    %v572 = vpack.c.b16 %v570, %v569
    %v576 = vsel %vm115, %v561, 0
    %578 = vmatpush.bf16.msra.mxu0 0
    %579 = vmatpush.bf16.msra.mxu0 0
    %580 = vmatpush.bf16.msra.mxu0 0
    %581 = vmatpush.bf16.msra.mxu0 0
    %582 = vmatpush.bf16.msra.mxu0 0
    %583 = vmatpush.bf16.msra.mxu0 0
    %584 = vmatpush.bf16.msra.mxu0 %v572
    %585 = vmatpush.bf16.msra.mxu0 %v571
    %586 = vmatmul.bf16.gmra.mxu0 %v576
    %v587 = vpop.f32.mrf.mxu0
    %v588 = vadd.f32 %v562, %v587
    %v589 = vpop.f32.mrf.mxu0
    %v590 = vadd.f32 %v562, %v589
    %591 = vdwg.mxu0
    %v592 = vmul.f32 %v588, 0.5
    %v593 = vmul.f32 %v590, 0.5
    %v594 = vmul.f32 %v588, 0.044715
    %v595 = vmul.f32 %v590, 0.044715
    %v596 = vmul.f32 %v594, %v588
    %v597 = vmul.f32 %v595, %v590
    %v598 = vmul.f32 %v596, %v588
    %v599 = vmul.f32 %v597, %v590
    %v600 = vadd.f32 %v588, %v598
    %v601 = vadd.f32 %v590, %v599
    %v602 = vmul.f32 %v600, 0.7978846
    %v603 = vmul.f32 %v601, 0.7978846
    %v604 = vtanh.pop %v602
    %v605 = vtanh.pop %v603
    %v606 = vadd.f32 %v604, 1.0
    %v607 = vadd.f32 %v605, 1.0
    %v608 = vmul.f32 %v592, %v606
    %v609 = vmul.f32 %v593, %v607
    %v610 = vpack.c.bf16 %v609, %v608
    %v611 = vperm.slane %v193, 3
    %v620 = vunpack.c.l.b16 %v185
    %v621 = vunpack.c.l.b16 %v186
    %v622 = vunpack.c.l.b16 %v187
    %v623 = vunpack.c.l.b16 %v188
    %v624 = vunpack.c.l.b16 %v189
    %v625 = vunpack.c.l.b16 %v190
    %v626 = vunpack.c.l.b16 %v191
    %v627 = vunpack.c.l.b16 %v192
    %v628 = vpack.c.b16 %v621, %v620
    %v629 = vpack.c.b16 %v623, %v622
    %v630 = vpack.c.b16 %v625, %v624
    %v631 = vpack.c.b16 %v627, %v626
    %vm636 = vcmask 523264
    %v638 = vsel %vm636, %v610, 0
    %640 = vmatpush.bf16.msra.mxu0 0
    %641 = vmatpush.bf16.msra.mxu0 0
    %642 = vmatpush.bf16.msra.mxu0 0
    %643 = vmatpush.bf16.msra.mxu0 0
    %644 = vmatpush.bf16.msra.mxu0 %v631
    %645 = vmatpush.bf16.msra.mxu0 %v630
    %646 = vmatpush.bf16.msra.mxu0 %v629
    %647 = vmatpush.bf16.msra.mxu0 %v628
    %648 = vmatmul.bf16.gmra.mxu0 %v638
    %v649 = vpop.f32.mrf.mxu0
    %v650 = vadd.f32 %v611, %v649
    %v651 = vpop.f32.mrf.mxu0
    %v652 = vadd.f32 %v611, %v651
    %653 = vdwg.mxu0
    %v654 = vadd.f32 %v559, %v650
    %v655 = vadd.f32 %v560, %v652
    %v656 = vsel %vm115, %v654, 0.0
    %657 = vadd.xlane.f32.xlu0 %v656
    %v658 = vpop.xlane.xlu0 %657
    %v659 = vsel %vm115, %v655, 0.0
    %660 = vadd.xlane.f32.xlu0 %v659
    %v661 = vpop.xlane.xlu0 %660
    %v662 = vmul.f32 %v658, %v128
    %v663 = vmul.f32 %v661, %v128
    %v664 = vsub.f32 %v654, %v662
    %v665 = vsub.f32 %v655, %v663
    %v666 = vmul.f32 %v664, %v664
    %v667 = vmul.f32 %v665, %v665
    %v668 = vsel %vm115, %v666, 0.0
    %669 = vadd.xlane.f32.xlu0 %v668
    %v670 = vpop.xlane.xlu0 %669
    %v671 = vsel %vm115, %v667, 0.0
    %672 = vadd.xlane.f32.xlu0 %v671
    %v673 = vpop.xlane.xlu0 %672
    %v674 = vmul.f32 %v670, %v128
    %v675 = vmul.f32 %v673, %v128
    %v676 = vadd.f32 %v674, 1e-12
    %v677 = vadd.f32 %v675, 1e-12
    %v678 = vrsqrt.pop %v676
    %v679 = vmul.f32 %v678, %v676
    %v680 = vmul.f32 %v679, %v678
    %v681 = vmul.f32 0.5, %v680
    %v682 = vsub.f32 1.5, %v681
    %v683 = vmul.f32 %v678, %v682
    %vm684 = vweird.f32 %v676
    %vm685 = vweird.f32 %v678
    %vm686 = vmor %vm684, %vm685
    %v687 = vsel %vm686, %v678, %v683
    %v688 = vrsqrt.pop %v677
    %v689 = vmul.f32 %v688, %v677
    %v690 = vmul.f32 %v689, %v688
    %v691 = vmul.f32 0.5, %v690
    %v692 = vsub.f32 1.5, %v691
    %v693 = vmul.f32 %v688, %v692
    %vm694 = vweird.f32 %v677
    %vm695 = vweird.f32 %v688
    %vm696 = vmor %vm694, %vm695
    %v697 = vsel %vm696, %v688, %v693
    %v698 = vmul.f32 %v664, %v687
    %v699 = vmul.f32 %v665, %v697
    %v700 = vperm.slane %v193, 6
    %v701 = vmul.f32 %v698, %v700
    %v702 = vmul.f32 %v699, %v700
    %v703 = vperm.slane %v193, 7
    %v704 = vadd.f32 %v701, %v703
    %v705 = vadd.f32 %v702, %v703
    %s706 = scalar_lea.vmem %s3, 16
    %v707 = vld [vmem:[%s706] sm:$0xf]
    %v708 = vld [vmem:[%s706 + $0x4] sm:$0xf]
    %v709 = vld [vmem:[%s706 + $0x8] sm:$0xf]
    %v710 = vld [vmem:[%s706 + $0xc] sm:$0xf]
    %s711 = scalar_lea.vmem %s4, 16
    %v712 = vld [vmem:[%s711] sm:$0xf]
    %v713 = vld [vmem:[%s711 + $0x4] sm:$0xf]
    %v714 = vld [vmem:[%s711 + $0x8] sm:$0xf]
    %v715 = vld [vmem:[%s711 + $0xc] sm:$0xf]
    %s716 = scalar_lea.vmem %s5, 16
    %v717 = vld [vmem:[%s716] sm:$0xf]
    %v718 = vld [vmem:[%s716 + $0x4] sm:$0xf]
    %v719 = vld [vmem:[%s716 + $0x8] sm:$0xf]
    %v720 = vld [vmem:[%s716 + $0xc] sm:$0xf]
    %s721 = scalar_lea.vmem %s6, 32
    %v722 = vld [vmem:[%s721] sm:$0xf]
    %v723 = vld [vmem:[%s721 + $0x4] sm:$0xf]
    %v724 = vld [vmem:[%s721 + $0x8] sm:$0xf]
    %v725 = vld [vmem:[%s721 + $0xc] sm:$0xf]
    %v726 = vld [vmem:[%s721 + $0x10] sm:$0xf]
    %v727 = vld [vmem:[%s721 + $0x14] sm:$0xf]
    %v728 = vld [vmem:[%s721 + $0x18] sm:$0xf]
    %v729 = vld [vmem:[%s721 + $0x1c] sm:$0xf]
    %s730 = scalar_lea.vmem [#allocation8], 8
    %v731 = vld [vmem:[%s730] sm:$0xff]
    %v732 = vpack.c.bf16 %v705, %v704
    %v733 = vperm.slane %v731, 0
    %v738 = vunpack.c.l.b16 %v707
    %v739 = vunpack.c.l.b16 %v708
    %v740 = vunpack.c.l.b16 %v709
    %v741 = vunpack.c.l.b16 %v710
    %v742 = vpack.c.b16 %v739, %v738
    %v743 = vpack.c.b16 %v741, %v740
    %v747 = vsel %vm115, %v732, 0
    %749 = vmatpush.bf16.msra.mxu0 0
    %750 = vmatpush.bf16.msra.mxu0 0
    %751 = vmatpush.bf16.msra.mxu0 0
    %752 = vmatpush.bf16.msra.mxu0 0
    %753 = vmatpush.bf16.msra.mxu0 0
    %754 = vmatpush.bf16.msra.mxu0 0
    %755 = vmatpush.bf16.msra.mxu0 %v743
    %756 = vmatpush.bf16.msra.mxu0 %v742
    %757 = vmatmul.bf16.gmra.mxu0 %v747
    %v758 = vpop.f32.mrf.mxu0
    %v759 = vadd.f32 %v733, %v758
    %v760 = vpop.f32.mrf.mxu0
    %v761 = vadd.f32 %v733, %v760
    %762 = vdwg.mxu0
    %v763 = vpack.c.bf16 %v759, %v759
    %v764 = vpack.c.bf16 %v761, %v761
    %v766 = vunpack.c.l.b16 %v763
    %v767 = vpack.c.b16 %v766, %v766
    %768 = vrot.lane.b32.xlu0 %v767, 112
    %v769 = vpop.permute.xlu0 %768
    %v771 = vsel %vm233, %v763, 0
    %v774 = vsel %vm233, %v769, 0
    %776 = vmatpush.bf16.xpose.msra.mxu0 0
    %777 = vmatpush.bf16.xpose.msra.mxu0 0
    %778 = vmatpush.bf16.xpose.msra.mxu0 0
    %779 = vmatpush.bf16.xpose.msra.mxu0 0
    %780 = vmatpush.bf16.xpose.msra.mxu0 0
    %781 = vmatpush.bf16.xpose.msra.mxu0 0
    %782 = vmatpush.bf16.xpose.msra.mxu0 0
    %783 = vmatpush.bf16.xpose.msra.mxu0 %v774
    %784 = vmatmul.bf16.gmra.mxu0 %v771
    %v785 = vpop.f32.mrf.mxu0
    %v786 = vadd.f32 0.0, %v785
    %v787 = vpop.f32.mrf.mxu0
    %788 = vdwg.mxu0
    %v789 = vmul.f32 %v786, 0.25
    %v790 = vadd.f32 %v789, %v254
    %v791 = vsel %vm256, %v790, -inf
    %792 = vmax.xlane.f32.xlu0 %v791
    %v793 = vpop.xlane.xlu0 %792
    %v794 = vsub.f32 %v790, %v793
    %v795 = vmul.f32 %v794, 1.442695
    %v796 = vpow.pop %v795
    %v797 = vsel %vm256, %v796, 0.0
    %798 = vadd.xlane.f32.xlu0 %v797
    %v799 = vpop.xlane.xlu0 %798
    %v800 = vrcp.pop %v799
    %v801 = vmul.f32 %v796, %v800
    %v802 = vpack.c.bf16 %v801, %v801
    %803 = vrot.lane.b32.xlu0 %v767, 96
    %v804 = vpop.permute.xlu0 %803
    %v806 = vsel %vm256, %v802, 0
    %v809 = vsel %vm274, %v804, 0
    %811 = vmatpush.bf16.msra.mxu0 0
    %812 = vmatpush.bf16.msra.mxu0 0
    %813 = vmatpush.bf16.msra.mxu0 0
    %814 = vmatpush.bf16.msra.mxu0 0
    %815 = vmatpush.bf16.msra.mxu0 0
    %816 = vmatpush.bf16.msra.mxu0 0
    %817 = vmatpush.bf16.msra.mxu0 0
    %818 = vmatpush.bf16.msra.mxu0 %v809
    %819 = vmatmul.bf16.gmra.mxu0 %v806
    %v820 = vpop.f32.mrf.mxu0
    %v821 = vadd.f32 0.0, %v820
    %v822 = vpop.f32.mrf.mxu0
    %823 = vdwg.mxu0
    %824 = vrot.lane.b32.xlu0 %v767, 80
    %v825 = vpop.permute.xlu0 %824
    %826 = vrot.lane.b32.xlu0 %v767, 64
    %v827 = vpop.permute.xlu0 %826
    %v829 = vsel %vm233, %v825, 0
    %v832 = vsel %vm233, %v827, 0
    %834 = vmatpush.bf16.xpose.msra.mxu0 0
    %835 = vmatpush.bf16.xpose.msra.mxu0 0
    %836 = vmatpush.bf16.xpose.msra.mxu0 0
    %837 = vmatpush.bf16.xpose.msra.mxu0 0
    %838 = vmatpush.bf16.xpose.msra.mxu0 0
    %839 = vmatpush.bf16.xpose.msra.mxu0 0
    %840 = vmatpush.bf16.xpose.msra.mxu0 0
    %841 = vmatpush.bf16.xpose.msra.mxu0 %v832
    %842 = vmatmul.bf16.gmra.mxu0 %v829
    %v843 = vpop.f32.mrf.mxu0
    %v844 = vadd.f32 0.0, %v843
    %v845 = vpop.f32.mrf.mxu0
    %846 = vdwg.mxu0
    %v847 = vmul.f32 %v844, 0.25
    %v848 = vadd.f32 %v847, %v254
    %v849 = vsel %vm256, %v848, -inf
    %850 = vmax.xlane.f32.xlu0 %v849
    %v851 = vpop.xlane.xlu0 %850
    %v852 = vsub.f32 %v848, %v851
    %v853 = vmul.f32 %v852, 1.442695
    %v854 = vpow.pop %v853
    %v855 = vsel %vm256, %v854, 0.0
    %856 = vadd.xlane.f32.xlu0 %v855
    %v857 = vpop.xlane.xlu0 %856
    %v858 = vrcp.pop %v857
    %v859 = vmul.f32 %v854, %v858
    %v860 = vpack.c.bf16 %v859, %v859
    %861 = vrot.lane.b32.xlu0 %v767, 48
    %v862 = vpop.permute.xlu0 %861
    %v864 = vsel %vm256, %v860, 0
    %v867 = vsel %vm274, %v862, 0
    %869 = vmatpush.bf16.msra.mxu0 0
    %870 = vmatpush.bf16.msra.mxu0 0
    %871 = vmatpush.bf16.msra.mxu0 0
    %872 = vmatpush.bf16.msra.mxu0 0
    %873 = vmatpush.bf16.msra.mxu0 0
    %874 = vmatpush.bf16.msra.mxu0 0
    %875 = vmatpush.bf16.msra.mxu0 0
    %876 = vmatpush.bf16.msra.mxu0 %v867
    %877 = vmatmul.bf16.gmra.mxu0 %v864
    %v878 = vpop.f32.mrf.mxu0
    %v879 = vadd.f32 0.0, %v878
    %v880 = vpop.f32.mrf.mxu0
    %881 = vdwg.mxu0
    %883 = vrot.lane.b32.xlu0 %v879, 16
    %v884 = vpop.permute.xlu0 %883
    %v886 = vsel %vm233, %v821, %v884
    %v888 = vunpack.c.l.b16 %v764
    %v889 = vpack.c.b16 %v888, %v888
    %890 = vrot.lane.b32.xlu0 %v889, 112
    %v891 = vpop.permute.xlu0 %890
    %v893 = vsel %vm233, %v764, 0
    %v896 = vsel %vm233, %v891, 0
    %898 = vmatpush.bf16.xpose.msra.mxu0 0
    %899 = vmatpush.bf16.xpose.msra.mxu0 0
    %900 = vmatpush.bf16.xpose.msra.mxu0 0
    %901 = vmatpush.bf16.xpose.msra.mxu0 0
    %902 = vmatpush.bf16.xpose.msra.mxu0 0
    %903 = vmatpush.bf16.xpose.msra.mxu0 0
    %904 = vmatpush.bf16.xpose.msra.mxu0 0
    %905 = vmatpush.bf16.xpose.msra.mxu0 %v896
    %906 = vmatmul.bf16.gmra.mxu0 %v893
    %v907 = vpop.f32.mrf.mxu0
    %v908 = vadd.f32 0.0, %v907
    %v909 = vpop.f32.mrf.mxu0
    %910 = vdwg.mxu0
    %v911 = vmul.f32 %v908, 0.25
    %v912 = vadd.f32 %v911, %v380
    %v913 = vsel %vm256, %v912, -inf
    %914 = vmax.xlane.f32.xlu0 %v913
    %v915 = vpop.xlane.xlu0 %914
    %v916 = vsub.f32 %v912, %v915
    %v917 = vmul.f32 %v916, 1.442695
    %v918 = vpow.pop %v917
    %v919 = vsel %vm256, %v918, 0.0
    %920 = vadd.xlane.f32.xlu0 %v919
    %v921 = vpop.xlane.xlu0 %920
    %v922 = vrcp.pop %v921
    %v923 = vmul.f32 %v918, %v922
    %v924 = vpack.c.bf16 %v923, %v923
    %925 = vrot.lane.b32.xlu0 %v889, 96
    %v926 = vpop.permute.xlu0 %925
    %v928 = vsel %vm256, %v924, 0
    %v931 = vsel %vm274, %v926, 0
    %933 = vmatpush.bf16.msra.mxu0 0
    %934 = vmatpush.bf16.msra.mxu0 0
    %935 = vmatpush.bf16.msra.mxu0 0
    %936 = vmatpush.bf16.msra.mxu0 0
    %937 = vmatpush.bf16.msra.mxu0 0
    %938 = vmatpush.bf16.msra.mxu0 0
    %939 = vmatpush.bf16.msra.mxu0 0
    %940 = vmatpush.bf16.msra.mxu0 %v931
    %941 = vmatmul.bf16.gmra.mxu0 %v928
    %v942 = vpop.f32.mrf.mxu0
    %v943 = vadd.f32 0.0, %v942
    %v944 = vpop.f32.mrf.mxu0
    %945 = vdwg.mxu0
    %946 = vrot.lane.b32.xlu0 %v889, 80
    %v947 = vpop.permute.xlu0 %946
    %948 = vrot.lane.b32.xlu0 %v889, 64
    %v949 = vpop.permute.xlu0 %948
    %v951 = vsel %vm233, %v947, 0
    %v954 = vsel %vm233, %v949, 0
    %956 = vmatpush.bf16.xpose.msra.mxu0 0
    %957 = vmatpush.bf16.xpose.msra.mxu0 0
    %958 = vmatpush.bf16.xpose.msra.mxu0 0
    %959 = vmatpush.bf16.xpose.msra.mxu0 0
    %960 = vmatpush.bf16.xpose.msra.mxu0 0
    %961 = vmatpush.bf16.xpose.msra.mxu0 0
    %962 = vmatpush.bf16.xpose.msra.mxu0 0
    %963 = vmatpush.bf16.xpose.msra.mxu0 %v954
    %964 = vmatmul.bf16.gmra.mxu0 %v951
    %v965 = vpop.f32.mrf.mxu0
    %v966 = vadd.f32 0.0, %v965
    %v967 = vpop.f32.mrf.mxu0
    %968 = vdwg.mxu0
    %v969 = vmul.f32 %v966, 0.25
    %v970 = vadd.f32 %v969, %v380
    %v971 = vsel %vm256, %v970, -inf
    %972 = vmax.xlane.f32.xlu0 %v971
    %v973 = vpop.xlane.xlu0 %972
    %v974 = vsub.f32 %v970, %v973
    %v975 = vmul.f32 %v974, 1.442695
    %v976 = vpow.pop %v975
    %v977 = vsel %vm256, %v976, 0.0
    %978 = vadd.xlane.f32.xlu0 %v977
    %v979 = vpop.xlane.xlu0 %978
    %v980 = vrcp.pop %v979
    %v981 = vmul.f32 %v976, %v980
    %v982 = vpack.c.bf16 %v981, %v981
    %983 = vrot.lane.b32.xlu0 %v889, 48
    %v984 = vpop.permute.xlu0 %983
    %v986 = vsel %vm256, %v982, 0
    %v989 = vsel %vm274, %v984, 0
    %991 = vmatpush.bf16.msra.mxu0 0
    %992 = vmatpush.bf16.msra.mxu0 0
    %993 = vmatpush.bf16.msra.mxu0 0
    %994 = vmatpush.bf16.msra.mxu0 0
    %995 = vmatpush.bf16.msra.mxu0 0
    %996 = vmatpush.bf16.msra.mxu0 0
    %997 = vmatpush.bf16.msra.mxu0 0
    %998 = vmatpush.bf16.msra.mxu0 %v989
    %999 = vmatmul.bf16.gmra.mxu0 %v986
    %v1000 = vpop.f32.mrf.mxu0
    %v1001 = vadd.f32 0.0, %v1000
    %v1002 = vpop.f32.mrf.mxu0
    %1003 = vdwg.mxu0
    %1005 = vrot.lane.b32.xlu0 %v1001, 16
    %v1006 = vpop.permute.xlu0 %1005
    %v1008 = vsel %vm233, %v943, %v1006
    %v1009 = vpack.c.bf16 %v1008, %v886
    %v1010 = vperm.slane %v731, 1
    %v1015 = vunpack.c.l.b16 %v712
    %v1016 = vunpack.c.l.b16 %v713
    %v1017 = vunpack.c.l.b16 %v714
    %v1018 = vunpack.c.l.b16 %v715
    %v1019 = vpack.c.b16 %v1016, %v1015
    %v1020 = vpack.c.b16 %v1018, %v1017
    %v1024 = vsel %vm115, %v1009, 0
    %1026 = vmatpush.bf16.msra.mxu0 0
    %1027 = vmatpush.bf16.msra.mxu0 0
    %1028 = vmatpush.bf16.msra.mxu0 0
    %1029 = vmatpush.bf16.msra.mxu0 0
    %1030 = vmatpush.bf16.msra.mxu0 0
    %1031 = vmatpush.bf16.msra.mxu0 0
    %1032 = vmatpush.bf16.msra.mxu0 %v1020
    %1033 = vmatpush.bf16.msra.mxu0 %v1019
    %1034 = vmatmul.bf16.gmra.mxu0 %v1024
    %v1035 = vpop.f32.mrf.mxu0
    %v1036 = vadd.f32 %v1010, %v1035
    %v1037 = vpop.f32.mrf.mxu0
    %v1038 = vadd.f32 %v1010, %v1037
    %1039 = vdwg.mxu0
    %v1040 = vadd.f32 %v704, %v1036
    %v1041 = vadd.f32 %v705, %v1038
    %v1042 = vsel %vm115, %v1040, 0.0
    %1043 = vadd.xlane.f32.xlu0 %v1042
    %v1044 = vpop.xlane.xlu0 %1043
    %v1045 = vsel %vm115, %v1041, 0.0
    %1046 = vadd.xlane.f32.xlu0 %v1045
    %v1047 = vpop.xlane.xlu0 %1046
    %v1048 = vmul.f32 %v1044, %v128
    %v1049 = vmul.f32 %v1047, %v128
    %v1050 = vsub.f32 %v1040, %v1048
    %v1051 = vsub.f32 %v1041, %v1049
    %v1052 = vmul.f32 %v1050, %v1050
    %v1053 = vmul.f32 %v1051, %v1051
    %v1054 = vsel %vm115, %v1052, 0.0
    %1055 = vadd.xlane.f32.xlu0 %v1054
    %v1056 = vpop.xlane.xlu0 %1055
    %v1057 = vsel %vm115, %v1053, 0.0
    %1058 = vadd.xlane.f32.xlu0 %v1057
    %v1059 = vpop.xlane.xlu0 %1058
    %v1060 = vmul.f32 %v1056, %v128
    %v1061 = vmul.f32 %v1059, %v128
    %v1062 = vadd.f32 %v1060, 1e-12
    %v1063 = vadd.f32 %v1061, 1e-12
    %v1064 = vrsqrt.pop %v1062
    %v1065 = vmul.f32 %v1064, %v1062
    %v1066 = vmul.f32 %v1065, %v1064
    %v1067 = vmul.f32 0.5, %v1066
    %v1068 = vsub.f32 1.5, %v1067
    %v1069 = vmul.f32 %v1064, %v1068
    %vm1070 = vweird.f32 %v1062
    %vm1071 = vweird.f32 %v1064
    %vm1072 = vmor %vm1070, %vm1071
    %v1073 = vsel %vm1072, %v1064, %v1069
    %v1074 = vrsqrt.pop %v1063
    %v1075 = vmul.f32 %v1074, %v1063
    %v1076 = vmul.f32 %v1075, %v1074
    %v1077 = vmul.f32 0.5, %v1076
    %v1078 = vsub.f32 1.5, %v1077
    %v1079 = vmul.f32 %v1074, %v1078
    %vm1080 = vweird.f32 %v1063
    %vm1081 = vweird.f32 %v1074
    %vm1082 = vmor %vm1080, %vm1081
    %v1083 = vsel %vm1082, %v1074, %v1079
    %v1084 = vmul.f32 %v1050, %v1073
    %v1085 = vmul.f32 %v1051, %v1083
    %v1086 = vperm.slane %v731, 4
    %v1087 = vmul.f32 %v1084, %v1086
    %v1088 = vmul.f32 %v1085, %v1086
    %v1089 = vperm.slane %v731, 5
    %v1090 = vadd.f32 %v1087, %v1089
    %v1091 = vadd.f32 %v1088, %v1089
    %v1092 = vpack.c.bf16 %v1091, %v1090
    %v1093 = vperm.slane %v731, 2
    %v1098 = vunpack.c.l.b16 %v717
    %v1099 = vunpack.c.l.b16 %v718
    %v1100 = vunpack.c.l.b16 %v719
    %v1101 = vunpack.c.l.b16 %v720
    %v1102 = vpack.c.b16 %v1099, %v1098
    %v1103 = vpack.c.b16 %v1101, %v1100
    %v1107 = vsel %vm115, %v1092, 0
    %1109 = vmatpush.bf16.msra.mxu0 0
    %1110 = vmatpush.bf16.msra.mxu0 0
    %1111 = vmatpush.bf16.msra.mxu0 0
    %1112 = vmatpush.bf16.msra.mxu0 0
    %1113 = vmatpush.bf16.msra.mxu0 0
    %1114 = vmatpush.bf16.msra.mxu0 0
    %1115 = vmatpush.bf16.msra.mxu0 %v1103
    %1116 = vmatpush.bf16.msra.mxu0 %v1102
    %1117 = vmatmul.bf16.gmra.mxu0 %v1107
    %v1118 = vpop.f32.mrf.mxu0
    %v1119 = vadd.f32 %v1093, %v1118
    %v1120 = vpop.f32.mrf.mxu0
    %v1121 = vadd.f32 %v1093, %v1120
    %1122 = vdwg.mxu0
    %v1123 = vmul.f32 %v1119, 0.5
    %v1124 = vmul.f32 %v1121, 0.5
    %v1125 = vmul.f32 %v1119, 0.044715
    %v1126 = vmul.f32 %v1121, 0.044715
    %v1127 = vmul.f32 %v1125, %v1119
    %v1128 = vmul.f32 %v1126, %v1121
    %v1129 = vmul.f32 %v1127, %v1119
    %v1130 = vmul.f32 %v1128, %v1121
    %v1131 = vadd.f32 %v1119, %v1129
    %v1132 = vadd.f32 %v1121, %v1130
    %v1133 = vmul.f32 %v1131, 0.7978846
    %v1134 = vmul.f32 %v1132, 0.7978846
    %v1135 = vtanh.pop %v1133
    %v1136 = vtanh.pop %v1134
    %v1137 = vadd.f32 %v1135, 1.0
    %v1138 = vadd.f32 %v1136, 1.0
    %v1139 = vmul.f32 %v1123, %v1137
    %v1140 = vmul.f32 %v1124, %v1138
    %v1141 = vpack.c.bf16 %v1140, %v1139
    %v1142 = vperm.slane %v731, 3
    %v1151 = vunpack.c.l.b16 %v722
    %v1152 = vunpack.c.l.b16 %v723
    %v1153 = vunpack.c.l.b16 %v724
    %v1154 = vunpack.c.l.b16 %v725
    %v1155 = vunpack.c.l.b16 %v726
    %v1156 = vunpack.c.l.b16 %v727
    %v1157 = vunpack.c.l.b16 %v728
    %v1158 = vunpack.c.l.b16 %v729
    %v1159 = vpack.c.b16 %v1152, %v1151
    %v1160 = vpack.c.b16 %v1154, %v1153
    %v1161 = vpack.c.b16 %v1156, %v1155
    %v1162 = vpack.c.b16 %v1158, %v1157
    %v1168 = vsel %vm636, %v1141, 0
    %1170 = vmatpush.bf16.msra.mxu0 0
    %1171 = vmatpush.bf16.msra.mxu0 0
    %1172 = vmatpush.bf16.msra.mxu0 0
    %1173 = vmatpush.bf16.msra.mxu0 0
    %1174 = vmatpush.bf16.msra.mxu0 %v1162
    %1175 = vmatpush.bf16.msra.mxu0 %v1161
    %1176 = vmatpush.bf16.msra.mxu0 %v1160
    %1177 = vmatpush.bf16.msra.mxu0 %v1159
    %1178 = vmatmul.bf16.gmra.mxu0 %v1168
    %v1179 = vpop.f32.mrf.mxu0
    %v1180 = vadd.f32 %v1142, %v1179
    %v1181 = vpop.f32.mrf.mxu0
    %v1182 = vadd.f32 %v1142, %v1181
    %1183 = vdwg.mxu0
    %v1184 = vadd.f32 %v1090, %v1180
    %v1185 = vadd.f32 %v1091, %v1182
    %v1186 = vsel %vm115, %v1184, 0.0
    %1187 = vadd.xlane.f32.xlu0 %v1186
    %v1188 = vpop.xlane.xlu0 %1187
    %v1189 = vsel %vm115, %v1185, 0.0
    %1190 = vadd.xlane.f32.xlu0 %v1189
    %v1191 = vpop.xlane.xlu0 %1190
    %v1192 = vmul.f32 %v1188, %v128
    %v1193 = vmul.f32 %v1191, %v128
    %v1194 = vsub.f32 %v1184, %v1192
    %v1195 = vsub.f32 %v1185, %v1193
    %v1196 = vmul.f32 %v1194, %v1194
    %v1197 = vmul.f32 %v1195, %v1195
    %v1198 = vsel %vm115, %v1196, 0.0
    %1199 = vadd.xlane.f32.xlu0 %v1198
    %v1200 = vpop.xlane.xlu0 %1199
    %v1201 = vsel %vm115, %v1197, 0.0
    %1202 = vadd.xlane.f32.xlu0 %v1201
    %v1203 = vpop.xlane.xlu0 %1202
    %v1204 = vmul.f32 %v1200, %v128
    %v1205 = vmul.f32 %v1203, %v128
    %v1206 = vadd.f32 %v1204, 1e-12
    %v1207 = vadd.f32 %v1205, 1e-12
    %v1208 = vrsqrt.pop %v1206
    %v1209 = vmul.f32 %v1208, %v1206
    %v1210 = vmul.f32 %v1209, %v1208
    %v1211 = vmul.f32 0.5, %v1210
    %v1212 = vsub.f32 1.5, %v1211
    %v1213 = vmul.f32 %v1208, %v1212
    %vm1214 = vweird.f32 %v1206
    %vm1215 = vweird.f32 %v1208
    %vm1216 = vmor %vm1214, %vm1215
    %v1217 = vsel %vm1216, %v1208, %v1213
    %v1218 = vrsqrt.pop %v1207
    %v1219 = vmul.f32 %v1218, %v1207
    %v1220 = vmul.f32 %v1219, %v1218
    %v1221 = vmul.f32 0.5, %v1220
    %v1222 = vsub.f32 1.5, %v1221
    %v1223 = vmul.f32 %v1218, %v1222
    %vm1224 = vweird.f32 %v1207
    %vm1225 = vweird.f32 %v1218
    %vm1226 = vmor %vm1224, %vm1225
    %v1227 = vsel %vm1226, %v1218, %v1223
    %v1228 = vmul.f32 %v1194, %v1217
    %v1229 = vmul.f32 %v1195, %v1227
    %v1230 = vperm.slane %v731, 6
    %v1231 = vmul.f32 %v1228, %v1230
    %v1232 = vmul.f32 %v1229, %v1230
    %v1233 = vperm.slane %v731, 7
    %v1234 = vadd.f32 %v1231, %v1233
    %v1235 = vadd.f32 %v1232, %v1233
    %v1237 = vrot.slane %v1235, 7
    %vm1239 = vcmask 1040384
    %v1240 = vsel %vm1239, %v1234, %v1237
    %v1241 = vpack.c.bf16 %v1240, %v1240
    %v1242 = vld [vmem:[#allocation10] sm:$0xf]
    %v1243 = vld [vmem:[#allocation10 + $0x4] sm:$0xf]
    %v1244 = vld [vmem:[#allocation10 + $0x8] sm:$0xf]
    %v1245 = vld [vmem:[#allocation10 + $0xc] sm:$0xf]
    %v1246 = vld [vmem:[%s9] sm:$0x1]
    %v1248 = vperm.slane %v1246, 0
    %v1254 = vunpack.c.l.b16 %v1242
    %v1255 = vunpack.c.l.b16 %v1243
    %v1256 = vunpack.c.l.b16 %v1244
    %v1257 = vunpack.c.l.b16 %v1245
    %v1258 = vpack.c.b16 %v1255, %v1254
    %v1259 = vpack.c.b16 %v1257, %v1256
    %v1263 = vsel %vm115, %v1241, 0
    %1265 = vmatpush.bf16.msra.mxu0 0
    %1266 = vmatpush.bf16.msra.mxu0 0
    %1267 = vmatpush.bf16.msra.mxu0 0
    %1268 = vmatpush.bf16.msra.mxu0 0
    %1269 = vmatpush.bf16.msra.mxu0 0
    %1270 = vmatpush.bf16.msra.mxu0 0
    %1271 = vmatpush.bf16.msra.mxu0 %v1259
    %1272 = vmatpush.bf16.msra.mxu0 %v1258
    %1273 = vmatmul.bf16.gmra.mxu0 %v1263
    %v1274 = vpop.f32.mrf.mxu0
    %v1275 = vadd.f32 %v1248, %v1274
    %v1276 = vpop.f32.mrf.mxu0
    %1277 = vdwg.mxu0
    %1278 = vst [vmem:[#allocation11] sm:$0x3] %v1275
    // Predicated region
    $region62: #{tpu_custom_call.1} parent=1 // pred_check
      _
    $region63: #{tpu_custom_call.1} parent=1 // pred_check_branch
      %1280 = sbr.rel (0) target = $region65
    $region64: #{tpu_custom_call.1} parent=1 // pred_region
      %1282 = vsyncadd [#allocation4], 0
      %s1284 = sshll.u32 [#allocation11], 4
      %s1285 = int_to_ptr.vmem [resolvable:$true] %s1284
      %s1286 = sshll.u32 %s10, 4
      %s1287 = int_to_ptr.hbm [resolvable:$true] %s1286
      %1289 = dma.vmem_to_hbm [thread:$0]  %s1285, 32, %s1287, [#allocation4]
    $region65: #{tpu_custom_call.1} parent=1 // pred_fallthru
      _
    // Predicated region
    $region66: #{tpu_custom_call.1} parent=1 // pred_check
      _
    $region67: #{tpu_custom_call.1} parent=1 // pred_check_branch
      %1291 = sbr.rel (0) target = $region69
    $region68: #{tpu_custom_call.1} parent=1 // pred_region
      %1293 = dma.done [#allocation4], 32
    $region69: #{tpu_custom_call.1} parent=1 // pred_fallthru
      _
    %1294 = vsyncpa [#allocation3], 1
    %1295 = vsyncpa [#allocation6], 1
    %1296 = vsyncpa [#allocation9], 1
    %1297 = vsyncpa [#allocation4], 1

</llo_original>
